<compile_context>
chip_gen: v7x
topology: tpu7x:2x2x1
jax: 0.10.0
libtpu: 0.0.40
codegen_flags: <defaults>
</compile_context>

<pallas_src>
from functools import partial

import jax
import jax.numpy as jnp
from jax import lax
from jax.experimental import pallas as pl
from jax.experimental.pallas import tpu as pltpu

K = 3  # kernel size (pad = K // 2 = 1)


def _cpe_kernel(strip_rows, x_ref, top_ref, bot_ref, w_ref, b_ref, out_ref, xp_ref):
    """Depthwise 3x3 conv + bias + residual for one (batch, H-tile) block.

    x_ref:   (1, TH, W, C)   unpadded input rows of this tile
    top_ref: (1, 1, W, C)    row just above the tile (clamped; masked at t == 0)
    bot_ref: (1, 1, W, C)    row just below the tile (clamped; masked at t == last)
    w_ref:   (K, K, C)       depthwise weights
    b_ref:   (1, C)          bias
    out_ref: (1, TH, W, C)
    xp_ref:  (TH+2, W+2, C)  VMEM scratch: zero-padded tile in the INPUT dtype
    """
    t = pl.program_id(1)
    nt = pl.num_programs(1)
    TH, W, C = out_ref.shape[1], out_ref.shape[2], out_ref.shape[3]
    dt = xp_ref.dtype

    # ---- assemble the zero-padded (TH+2, W+2, C) tile in VMEM (no HBM-side pad) ----
    # pad columns (cover the 4 corner pixels too) -- tiny, always zero
    xp_ref[:, 0:1, :] = jnp.zeros((TH + 2, 1, C), dt)
    xp_ref[:, W + 1:W + 2, :] = jnp.zeros((TH + 2, 1, C), dt)
    # interior rows
    xp_ref[1:TH + 1, 1:W + 1, :] = x_ref[0]

    # top halo row: zero at the image border, otherwise the row just above the tile
    @pl.when(t == 0)
    def _():
        xp_ref[0:1, 1:W + 1, :] = jnp.zeros((1, W, C), dt)

    @pl.when(t > 0)
    def _():
        xp_ref[0:1, 1:W + 1, :] = top_ref[0]

    # bottom halo row
    @pl.when(t == nt - 1)
    def _():
        xp_ref[TH + 1:TH + 2, 1:W + 1, :] = jnp.zeros((1, W, C), dt)

    @pl.when(t < nt - 1)
    def _():
        xp_ref[TH + 1:TH + 2, 1:W + 1, :] = bot_ref[0]

    # ---- hoisted weight/bias load + cast (once per grid step, not per tap) ----
    wf = w_ref[...].astype(jnp.float32)                       # (K, K, C)
    bf = b_ref[0].astype(jnp.float32).reshape(1, 1, C)        # (1, 1, C)
    w_tap = [[wf[i, j].reshape(1, 1, C) for j in range(K)] for i in range(K)]
    w_tap[1][1] = w_tap[1][1] + 1.0   # fold the residual (identity) into the center tap

    # ---- 9-tap MAC over small row strips: accumulator stays vreg-resident ----
    # NOTE: strips are unrolled at trace time; H per ConvPosEnc stage is small (<= 56).
    r0 = 0
    while r0 < TH:
        rr = min(strip_rows, TH - r0)
        # one load + one f32 cast per strip; reused by all 9 taps of these rows
        xs = xp_ref[r0:r0 + rr + 2, :, :].astype(jnp.float32)   # (rr+2, W+2, C)
        acc = jnp.broadcast_to(bf, (rr, W, C))                  # bias folded into init
        for j in range(K):
            xsj = xs[:, j:j + W, :]                             # W-shift (3 per strip)
            for i in range(K):
                acc = acc + xsj[i:i + rr] * w_tap[i][j]         # row offset: cheap slice
        out_ref[0, r0:r0 + rr, :, :] = acc.astype(out_ref.dtype)
        r0 += rr


def _vmem_info():
    """(physical VMEM capacity, padded-input-tile byte budget), generation-aware."""
    cap = 64 << 20                       # conservative fallback = v7x per-core VMEM
    try:
        info = pltpu.get_tpu_info()
        cap = int(getattr(info, "vmem_capacity_bytes", cap))
    except Exception:
        pass
    # per-step footprint ~ 2x in + 2x out (double-buffered) + scratch ~ 5x tile
    # => 128 MiB chips (v5e/v6e) -> 8 MiB tiles; 64 MiB (v7x) -> 4 MiB tiles.
    budget = max(1 << 20, min(8 << 20, cap // 16))
    return cap, budget


def _choose_tile_h(H, W, C, itemsize, budget_bytes, max_th=None):
    """Largest divisor of H (<= max_th) whose padded input tile fits the byte budget."""
    if max_th is None:
        max_th = H
    best = 1
    for th in range(1, H + 1):
        if H % th or th > max_th:
            continue
        if (th + 2) * (W + 2) * C * itemsize <= budget_bytes:
            best = th
    return best


def _choose_strip_rows(TH, W, C):
    """Rows per MAC strip so the f32 accumulator (~R*ceil(W/8)*ceil(C/128) vregs) stays
    register-resident (<= ~16 vregs)."""
    per_row = (-(-W // 8)) * (-(-C // 128))
    r = max(1, 16 // per_row)
    return int(min(r, 8, TH))


def conv_pos_enc(x, size, weight, bias, *, tile_h=None):
    """ConvPosEnc forward.

    x:      (B, N, C) with N = H*W
    size:   (H, W)
    weight: (C, 1, K, K)  -- PyTorch nn.Conv2d(dim, dim, 3, 1, 1, groups=dim) layout
    bias:   (C,)
    returns (B, N, C)
    """
    B, N, C = x.shape
    H, W = size
    assert N == H * W
    assert weight.shape == (C, 1, K, K)

    # PyTorch (C,1,K,K) -> kernel (K,K,C): one-time layout fix outside the kernel
    w_kkc = jnp.transpose(weight[:, 0, :, :], (1, 2, 0))
    bias2d = bias.reshape(1, C)

    cap, budget = _vmem_info()
    if tile_h is None:
        # At B == 1 force >= 2 H-tiles so both parallel grid axes have work
        # (lets v7x's two TensorCores split the kernel).
        max_th = H if (B > 1 or H < 2) else max(1, H // 2)
        tile_h = _choose_tile_h(H, W, C, x.dtype.itemsize, budget, max_th=max_th)
    assert H % tile_h == 0, "tile_h must divide H"
    # TODO(synk): support non-divisor H via a cdiv grid + row masking.
    TH = tile_h
    nt = H // TH
    R = _choose_strip_rows(TH, W, C)

    feat = x.reshape(B, H, W, C)      # NHWC, free reshape

    # Size the scoped VMEM limit from the actual per-step footprint.
    itemsize = x.dtype.itemsize
    tile_bytes = TH * W * C * itemsize
    pad_bytes = (TH + 2) * (W + 2) * C * itemsize
    need = (4 * tile_bytes            # double-buffered in + out
            + pad_bytes               # scratch
            + 4 * W * C * itemsize    # halo rows (double-buffered)
            + 4 * K * K * C * itemsize + (1 << 16))
    vmem_limit = int(min(max(32 << 20, 2 * need), 3 * cap // 4))

    out = pl.pallas_call(
        partial(_cpe_kernel, R),
        out_shape=jax.ShapeDtypeStruct((B, H, W, C), x.dtype),
        grid_spec=pltpu.PrefetchScalarGridSpec(
            num_scalar_prefetch=0,
            grid=(B, nt),
            in_specs=[
                # main tile: TH unpadded rows
                pl.BlockSpec((1, TH, W, C), lambda b, t: (b, t, 0, 0)),
                # halo row above (clamped at the top border; masked in-kernel)
                pl.BlockSpec((1, 1, W, C),
                             lambda b, t: (b, jnp.maximum(t * TH - 1, 0), 0, 0)),
                # halo row below (clamped at the bottom border; masked in-kernel)
                pl.BlockSpec((1, 1, W, C),
                             lambda b, t: (b, jnp.minimum((t + 1) * TH, H - 1), 0, 0)),
                pl.BlockSpec((K, K, C), lambda b, t: (0, 0, 0)),
                pl.BlockSpec((1, C), lambda b, t: (0, 0)),
            ],
            out_specs=pl.BlockSpec((1, TH, W, C), lambda b, t: (b, t, 0, 0)),
            scratch_shapes=[pltpu.VMEM((TH + 2, W + 2, C), x.dtype)],
        ),
        compiler_params=pltpu.CompilerParams(
            dimension_semantics=("parallel", "parallel"),
            vmem_limit_bytes=vmem_limit,
        ),
    )(feat, feat, feat, w_kkc, bias2d)

    return out.reshape(B, N, C)


def conv_pos_enc_ref(x, size, weight, bias):
    """Pure-JAX reference (lax depthwise conv), for correctness check."""
    B, N, C = x.shape
    H, W = size
    feat = x.reshape(B, H, W, C)
    w = jnp.transpose(weight[:, 0, :, :], (1, 2, 0)).reshape(K, K, 1, C)  # HWIO
    conv = lax.conv_general_dilated(
        feat, w, window_strides=(1, 1), padding="SAME",
        dimension_numbers=("NHWC", "HWIO", "NHWC"),
        feature_group_count=C)
    out = conv + bias[None, None, None, :] + feat
    return out.reshape(B, N, C)


if __name__ == "__main__":
    B, H, W, C = 2, 16, 16, 32
    N = H * W

    key = jax.random.PRNGKey(0)
    kx, kw, kb = jax.random.split(key, 3)
    x = jax.random.normal(kx, (B, N, C), dtype=jnp.float32)
    # PyTorch param shapes: weight (C, 1, K, K), bias (C,)
    weight = jax.random.normal(kw, (C, 1, K, K), dtype=jnp.float32) * 0.1
    bias = jax.random.normal(kb, (C,), dtype=jnp.float32) * 0.1

    ref = conv_pos_enc_ref(x, (H, W), weight, bias)

    # auto tile size (whole image per block at this small shape)
    out = jax.block_until_ready(conv_pos_enc(x, (H, W), weight, bias))
    assert out.shape == (B, N, C)
    assert jnp.allclose(out, ref, atol=1e-4, rtol=1e-4), "mismatch vs reference (auto tile)"

    # explicit H-tiling to exercise the halo-row path (grid = (B, 4))
    out_t = jax.block_until_ready(conv_pos_enc(x, (H, W), weight, bias, tile_h=4))
    assert jnp.allclose(out_t, ref, atol=1e-4, rtol=1e-4), "mismatch vs reference (tiled)"

    print("KERNEL_OK")
</pallas_src>

<mosaic_0001>
module attributes {stable_mosaic.version = 11 : i64} {
  func.func @_cpe_kernel(%arg0: i32, %arg1: i32, %arg2: memref<1x16x16x32xf32, #tpu.memory_space<vmem>>, %arg3: memref<1x1x16x32xf32, #tpu.memory_space<vmem>>, %arg4: memref<1x1x16x32xf32, #tpu.memory_space<vmem>>, %arg5: memref<3x3x32xf32, #tpu.memory_space<vmem>>, %arg6: memref<1x32xf32, #tpu.memory_space<vmem>>, %arg7: memref<1x16x16x32xf32, #tpu.memory_space<vmem>>, %arg8: memref<18x18x32xf32, #tpu.memory_space<vmem>>) attributes {dimension_semantics = [#tpu.dimension_semantics<parallel>, #tpu.dimension_semantics<parallel>], iteration_bounds = array<i64: 2, 1>, scalar_prefetch = 0 : i64, scratch_operands = 1 : i64, tpu.core_type = #tpu.core_type<tc>, window_params = [{transform_indices = @transform_0, window_bounds = array<i64: 1, 16, 16, 32>}, {transform_indices = @transform_1, window_bounds = array<i64: 1, 1, 16, 32>}, {transform_indices = @transform_2, window_bounds = array<i64: 1, 1, 16, 32>}, {pipeline_mode = #tpu.pipeline_mode<synchronous>, transform_indices = @transform_3, window_bounds = array<i64: 3, 3, 32>}, {pipeline_mode = #tpu.pipeline_mode<synchronous>, transform_indices = @transform_4, window_bounds = array<i64: 1, 32>}, {transform_indices = @transform_5, window_bounds = array<i64: 1, 16, 16, 32>}]} {
    %cst = arith.constant 0.000000e+00 : f32
    %0 = vector.broadcast %cst : f32 to vector<18x1x32xf32>
    %c0 = arith.constant 0 : index
    %c0_0 = arith.constant 0 : index
    %c0_1 = arith.constant 0 : index
    %1 = vector.load %arg8[%c0, %c0_0, %c0_1] : memref<18x18x32xf32, #tpu.memory_space<vmem>>, vector<18x1x32xf32>
    tpu.vector_store %arg8[%c0, %c0_0, %c0_1], %0 {strides = array<i32>} : memref<18x18x32xf32, #tpu.memory_space<vmem>>, vector<18x1x32xf32>,
    %cst_2 = arith.constant 0.000000e+00 : f32
    %2 = vector.broadcast %cst_2 : f32 to vector<18x1x32xf32>
    %c0_3 = arith.constant 0 : index
    %c17 = arith.constant 17 : index
    %c0_4 = arith.constant 0 : index
    %3 = vector.load %arg8[%c0_3, %c17, %c0_4] : memref<18x18x32xf32, #tpu.memory_space<vmem>>, vector<18x1x32xf32>
    tpu.vector_store %arg8[%c0_3, %c17, %c0_4], %2 {strides = array<i32>} : memref<18x18x32xf32, #tpu.memory_space<vmem>>, vector<18x1x32xf32>,
    %c0_5 = arith.constant 0 : index
    %c0_6 = arith.constant 0 : index
    %c0_7 = arith.constant 0 : index
    %c0_8 = arith.constant 0 : index
    %4 = vector.load %arg2[%c0_5, %c0_6, %c0_7, %c0_8] : memref<1x16x16x32xf32, #tpu.memory_space<vmem>>, vector<1x16x16x32xf32>
    %5 = vector.shape_cast %4 : vector<1x16x16x32xf32> to vector<16x16x32xf32>
    %c1 = arith.constant 1 : index
    %c1_9 = arith.constant 1 : index
    %c0_10 = arith.constant 0 : index
    %6 = vector.load %arg8[%c1, %c1_9, %c0_10] : memref<18x18x32xf32, #tpu.memory_space<vmem>>, vector<16x16x32xf32>
    tpu.vector_store %arg8[%c1, %c1_9, %c0_10], %5 {strides = array<i32>} : memref<18x18x32xf32, #tpu.memory_space<vmem>>, vector<16x16x32xf32>,
    %c0_i32 = arith.constant 0 : i32
    %7 = arith.cmpi eq, %arg1, %c0_i32 : i32
    %8 = arith.extui %7 : i1 to i32
    %c0_i32_11 = arith.constant 0 : i32
    %9 = arith.cmpi ne, %8, %c0_i32_11 : i32
    scf.if %9 {
      %cst_37 = arith.constant 0.000000e+00 : f32
      %142 = vector.broadcast %cst_37 : f32 to vector<1x16x32xf32>
      %c0_38 = arith.constant 0 : index
      %c1_39 = arith.constant 1 : index
      %c0_40 = arith.constant 0 : index
      %143 = vector.load %arg8[%c0_38, %c1_39, %c0_40] : memref<18x18x32xf32, #tpu.memory_space<vmem>>, vector<1x16x32xf32>
      tpu.vector_store %arg8[%c0_38, %c1_39, %c0_40], %142 {strides = array<i32>} : memref<18x18x32xf32, #tpu.memory_space<vmem>>, vector<1x16x32xf32>,
    } else {
    }
    %c0_i32_12 = arith.constant 0 : i32
    %10 = arith.cmpi sgt, %arg1, %c0_i32_12 : i32
    %11 = arith.extui %10 : i1 to i32
    %c0_i32_13 = arith.constant 0 : i32
    %12 = arith.cmpi ne, %11, %c0_i32_13 : i32
    scf.if %12 {
      %c0_37 = arith.constant 0 : index
      %c0_38 = arith.constant 0 : index
      %c0_39 = arith.constant 0 : index
      %c0_40 = arith.constant 0 : index
      %142 = vector.load %arg3[%c0_37, %c0_38, %c0_39, %c0_40] : memref<1x1x16x32xf32, #tpu.memory_space<vmem>>, vector<1x1x16x32xf32>
      %143 = vector.shape_cast %142 : vector<1x1x16x32xf32> to vector<1x16x32xf32>
      %c0_41 = arith.constant 0 : index
      %c1_42 = arith.constant 1 : index
      %c0_43 = arith.constant 0 : index
      %144 = vector.load %arg8[%c0_41, %c1_42, %c0_43] : memref<18x18x32xf32, #tpu.memory_space<vmem>>, vector<1x16x32xf32>
      tpu.vector_store %arg8[%c0_41, %c1_42, %c0_43], %143 {strides = array<i32>} : memref<18x18x32xf32, #tpu.memory_space<vmem>>, vector<1x16x32xf32>,
    } else {
    }
    %c0_i32_14 = arith.constant 0 : i32
    %13 = arith.cmpi eq, %arg1, %c0_i32_14 : i32
    %14 = arith.extui %13 : i1 to i32
    %c0_i32_15 = arith.constant 0 : i32
    %15 = arith.cmpi ne, %14, %c0_i32_15 : i32
    scf.if %15 {
      %cst_37 = arith.constant 0.000000e+00 : f32
      %142 = vector.broadcast %cst_37 : f32 to vector<1x16x32xf32>
      %c17_38 = arith.constant 17 : index
      %c1_39 = arith.constant 1 : index
      %c0_40 = arith.constant 0 : index
      %143 = vector.load %arg8[%c17_38, %c1_39, %c0_40] : memref<18x18x32xf32, #tpu.memory_space<vmem>>, vector<1x16x32xf32>
      tpu.vector_store %arg8[%c17_38, %c1_39, %c0_40], %142 {strides = array<i32>} : memref<18x18x32xf32, #tpu.memory_space<vmem>>, vector<1x16x32xf32>,
    } else {
    }
    %c0_i32_16 = arith.constant 0 : i32
    %16 = arith.cmpi slt, %arg1, %c0_i32_16 : i32
    %17 = arith.extui %16 : i1 to i32
    %c0_i32_17 = arith.constant 0 : i32
    %18 = arith.cmpi ne, %17, %c0_i32_17 : i32
    scf.if %18 {
      %c0_37 = arith.constant 0 : index
      %c0_38 = arith.constant 0 : index
      %c0_39 = arith.constant 0 : index
      %c0_40 = arith.constant 0 : index
      %142 = vector.load %arg4[%c0_37, %c0_38, %c0_39, %c0_40] : memref<1x1x16x32xf32, #tpu.memory_space<vmem>>, vector<1x1x16x32xf32>
      %143 = vector.shape_cast %142 : vector<1x1x16x32xf32> to vector<1x16x32xf32>
      %c17_41 = arith.constant 17 : index
      %c1_42 = arith.constant 1 : index
      %c0_43 = arith.constant 0 : index
      %144 = vector.load %arg8[%c17_41, %c1_42, %c0_43] : memref<18x18x32xf32, #tpu.memory_space<vmem>>, vector<1x16x32xf32>
      tpu.vector_store %arg8[%c17_41, %c1_42, %c0_43], %143 {strides = array<i32>} : memref<18x18x32xf32, #tpu.memory_space<vmem>>, vector<1x16x32xf32>,
    } else {
    }
    %c0_18 = arith.constant 0 : index
    %c0_19 = arith.constant 0 : index
    %c0_20 = arith.constant 0 : index
    %19 = vector.load %arg5[%c0_18, %c0_19, %c0_20] : memref<3x3x32xf32, #tpu.memory_space<vmem>>, vector<3x3x32xf32>
    %c0_21 = arith.constant 0 : index
    %c0_22 = arith.constant 0 : index
    %20 = vector.load %arg6[%c0_21, %c0_22] : memref<1x32xf32, #tpu.memory_space<vmem>>, vector<1x32xf32>
    %21 = vector.shape_cast %20 : vector<1x32xf32> to vector<32xf32>
    %22 = vector.shape_cast %21 : vector<32xf32> to vector<1x1x32xf32>
    %23 = vector.extract_strided_slice %19 {offsets = [0, 0, 0], sizes = [1, 1, 32], strides = [1, 1, 1]} : vector<3x3x32xf32> to vector<1x1x32xf32>
    %24 = vector.shape_cast %23 : vector<1x1x32xf32> to vector<32xf32>
    %25 = vector.shape_cast %24 : vector<32xf32> to vector<1x1x32xf32>
    %26 = vector.extract_strided_slice %19 {offsets = [0, 1, 0], sizes = [1, 1, 32], strides = [1, 1, 1]} : vector<3x3x32xf32> to vector<1x1x32xf32>
    %27 = vector.shape_cast %26 : vector<1x1x32xf32> to vector<32xf32>
    %28 = vector.shape_cast %27 : vector<32xf32> to vector<1x1x32xf32>
    %29 = vector.extract_strided_slice %19 {offsets = [0, 2, 0], sizes = [1, 1, 32], strides = [1, 1, 1]} : vector<3x3x32xf32> to vector<1x1x32xf32>
    %30 = vector.shape_cast %29 : vector<1x1x32xf32> to vector<32xf32>
    %31 = vector.shape_cast %30 : vector<32xf32> to vector<1x1x32xf32>
    %32 = vector.extract_strided_slice %19 {offsets = [1, 0, 0], sizes = [1, 1, 32], strides = [1, 1, 1]} : vector<3x3x32xf32> to vector<1x1x32xf32>
    %33 = vector.shape_cast %32 : vector<1x1x32xf32> to vector<32xf32>
    %34 = vector.shape_cast %33 : vector<32xf32> to vector<1x1x32xf32>
    %35 = vector.extract_strided_slice %19 {offsets = [1, 1, 0], sizes = [1, 1, 32], strides = [1, 1, 1]} : vector<3x3x32xf32> to vector<1x1x32xf32>
    %36 = vector.shape_cast %35 : vector<1x1x32xf32> to vector<32xf32>
    %37 = vector.shape_cast %36 : vector<32xf32> to vector<1x1x32xf32>
    %38 = vector.extract_strided_slice %19 {offsets = [1, 2, 0], sizes = [1, 1, 32], strides = [1, 1, 1]} : vector<3x3x32xf32> to vector<1x1x32xf32>
    %39 = vector.shape_cast %38 : vector<1x1x32xf32> to vector<32xf32>
    %40 = vector.shape_cast %39 : vector<32xf32> to vector<1x1x32xf32>
    %41 = vector.extract_strided_slice %19 {offsets = [2, 0, 0], sizes = [1, 1, 32], strides = [1, 1, 1]} : vector<3x3x32xf32> to vector<1x1x32xf32>
    %42 = vector.shape_cast %41 : vector<1x1x32xf32> to vector<32xf32>
    %43 = vector.shape_cast %42 : vector<32xf32> to vector<1x1x32xf32>
    %44 = vector.extract_strided_slice %19 {offsets = [2, 1, 0], sizes = [1, 1, 32], strides = [1, 1, 1]} : vector<3x3x32xf32> to vector<1x1x32xf32>
    %45 = vector.shape_cast %44 : vector<1x1x32xf32> to vector<32xf32>
    %46 = vector.shape_cast %45 : vector<32xf32> to vector<1x1x32xf32>
    %47 = vector.extract_strided_slice %19 {offsets = [2, 2, 0], sizes = [1, 1, 32], strides = [1, 1, 1]} : vector<3x3x32xf32> to vector<1x1x32xf32>
    %48 = vector.shape_cast %47 : vector<1x1x32xf32> to vector<32xf32>
    %49 = vector.shape_cast %48 : vector<32xf32> to vector<1x1x32xf32>
    %cst_23 = arith.constant 1.000000e+00 : f32
    %50 = vector.broadcast %cst_23 : f32 to vector<1x1x32xf32>
    %51 = arith.addf %37, %50 : vector<1x1x32xf32>
    %c0_24 = arith.constant 0 : index
    %c0_25 = arith.constant 0 : index
    %c0_26 = arith.constant 0 : index
    %52 = vector.load %arg8[%c0_24, %c0_25, %c0_26] : memref<18x18x32xf32, #tpu.memory_space<vmem>>, vector<10x18x32xf32>
    %53 = vector.shape_cast %22 : vector<1x1x32xf32> to vector<1x1x32xf32>
    %54 = vector.broadcast %53 : vector<1x1x32xf32> to vector<8x16x32xf32>
    %55 = vector.extract_strided_slice %52 {offsets = [0, 0, 0], sizes = [10, 16, 32], strides = [1, 1, 1]} : vector<10x18x32xf32> to vector<10x16x32xf32>
    %56 = vector.extract_strided_slice %55 {offsets = [0, 0, 0], sizes = [8, 16, 32], strides = [1, 1, 1]} : vector<10x16x32xf32> to vector<8x16x32xf32>
    %57 = vector.broadcast %25 : vector<1x1x32xf32> to vector<8x16x32xf32>
    %58 = arith.mulf %56, %57 : vector<8x16x32xf32>
    %59 = arith.addf %54, %58 : vector<8x16x32xf32>
    %60 = vector.extract_strided_slice %55 {offsets = [1, 0, 0], sizes = [8, 16, 32], strides = [1, 1, 1]} : vector<10x16x32xf32> to vector<8x16x32xf32>
    %61 = vector.broadcast %34 : vector<1x1x32xf32> to vector<8x16x32xf32>
    %62 = arith.mulf %60, %61 : vector<8x16x32xf32>
    %63 = arith.addf %59, %62 : vector<8x16x32xf32>
    %64 = vector.extract_strided_slice %55 {offsets = [2, 0, 0], sizes = [8, 16, 32], strides = [1, 1, 1]} : vector<10x16x32xf32> to vector<8x16x32xf32>
    %65 = vector.broadcast %43 : vector<1x1x32xf32> to vector<8x16x32xf32>
    %66 = arith.mulf %64, %65 : vector<8x16x32xf32>
    %67 = arith.addf %63, %66 : vector<8x16x32xf32>
    %68 = vector.extract_strided_slice %52 {offsets = [0, 1, 0], sizes = [10, 16, 32], strides = [1, 1, 1]} : vector<10x18x32xf32> to vector<10x16x32xf32>
    %69 = vector.extract_strided_slice %68 {offsets = [0, 0, 0], sizes = [8, 16, 32], strides = [1, 1, 1]} : vector<10x16x32xf32> to vector<8x16x32xf32>
    %70 = vector.broadcast %28 : vector<1x1x32xf32> to vector<8x16x32xf32>
    %71 = arith.mulf %69, %70 : vector<8x16x32xf32>
    %72 = arith.addf %67, %71 : vector<8x16x32xf32>
    %73 = vector.extract_strided_slice %68 {offsets = [1, 0, 0], sizes = [8, 16, 32], strides = [1, 1, 1]} : vector<10x16x32xf32> to vector<8x16x32xf32>
    %74 = vector.broadcast %51 : vector<1x1x32xf32> to vector<8x16x32xf32>
    %75 = arith.mulf %73, %74 : vector<8x16x32xf32>
    %76 = arith.addf %72, %75 : vector<8x16x32xf32>
    %77 = vector.extract_strided_slice %68 {offsets = [2, 0, 0], sizes = [8, 16, 32], strides = [1, 1, 1]} : vector<10x16x32xf32> to vector<8x16x32xf32>
    %78 = vector.broadcast %46 : vector<1x1x32xf32> to vector<8x16x32xf32>
    %79 = arith.mulf %77, %78 : vector<8x16x32xf32>
    %80 = arith.addf %76, %79 : vector<8x16x32xf32>
    %81 = vector.extract_strided_slice %52 {offsets = [0, 2, 0], sizes = [10, 16, 32], strides = [1, 1, 1]} : vector<10x18x32xf32> to vector<10x16x32xf32>
    %82 = vector.extract_strided_slice %81 {offsets = [0, 0, 0], sizes = [8, 16, 32], strides = [1, 1, 1]} : vector<10x16x32xf32> to vector<8x16x32xf32>
    %83 = vector.broadcast %31 : vector<1x1x32xf32> to vector<8x16x32xf32>
    %84 = arith.mulf %82, %83 : vector<8x16x32xf32>
    %85 = arith.addf %80, %84 : vector<8x16x32xf32>
    %86 = vector.extract_strided_slice %81 {offsets = [1, 0, 0], sizes = [8, 16, 32], strides = [1, 1, 1]} : vector<10x16x32xf32> to vector<8x16x32xf32>
    %87 = vector.broadcast %40 : vector<1x1x32xf32> to vector<8x16x32xf32>
    %88 = arith.mulf %86, %87 : vector<8x16x32xf32>
    %89 = arith.addf %85, %88 : vector<8x16x32xf32>
    %90 = vector.extract_strided_slice %81 {offsets = [2, 0, 0], sizes = [8, 16, 32], strides = [1, 1, 1]} : vector<10x16x32xf32> to vector<8x16x32xf32>
    %91 = vector.broadcast %49 : vector<1x1x32xf32> to vector<8x16x32xf32>
    %92 = arith.mulf %90, %91 : vector<8x16x32xf32>
    %93 = arith.addf %89, %92 : vector<8x16x32xf32>
    %c0_27 = arith.constant 0 : index
    %c0_28 = arith.constant 0 : index
    %c0_29 = arith.constant 0 : index
    %c0_30 = arith.constant 0 : index
    %94 = vector.load %arg7[%c0_27, %c0_28, %c0_29, %c0_30] : memref<1x16x16x32xf32, #tpu.memory_space<vmem>>, vector<1x8x16x32xf32>
    %95 = vector.shape_cast %94 : vector<1x8x16x32xf32> to vector<8x16x32xf32>
    %96 = vector.shape_cast %93 : vector<8x16x32xf32> to vector<1x8x16x32xf32>
    tpu.vector_store %arg7[%c0_27, %c0_28, %c0_29, %c0_30], %96 {strides = array<i32>} : memref<1x16x16x32xf32, #tpu.memory_space<vmem>>, vector<1x8x16x32xf32>,
    %c8 = arith.constant 8 : index
    %c0_31 = arith.constant 0 : index
    %c0_32 = arith.constant 0 : index
    %97 = vector.load %arg8[%c8, %c0_31, %c0_32] : memref<18x18x32xf32, #tpu.memory_space<vmem>>, vector<10x18x32xf32>
    %98 = vector.shape_cast %22 : vector<1x1x32xf32> to vector<1x1x32xf32>
    %99 = vector.broadcast %98 : vector<1x1x32xf32> to vector<8x16x32xf32>
    %100 = vector.extract_strided_slice %97 {offsets = [0, 0, 0], sizes = [10, 16, 32], strides = [1, 1, 1]} : vector<10x18x32xf32> to vector<10x16x32xf32>
    %101 = vector.extract_strided_slice %100 {offsets = [0, 0, 0], sizes = [8, 16, 32], strides = [1, 1, 1]} : vector<10x16x32xf32> to vector<8x16x32xf32>
    %102 = vector.broadcast %25 : vector<1x1x32xf32> to vector<8x16x32xf32>
    %103 = arith.mulf %101, %102 : vector<8x16x32xf32>
    %104 = arith.addf %99, %103 : vector<8x16x32xf32>
    %105 = vector.extract_strided_slice %100 {offsets = [1, 0, 0], sizes = [8, 16, 32], strides = [1, 1, 1]} : vector<10x16x32xf32> to vector<8x16x32xf32>
    %106 = vector.broadcast %34 : vector<1x1x32xf32> to vector<8x16x32xf32>
    %107 = arith.mulf %105, %106 : vector<8x16x32xf32>
    %108 = arith.addf %104, %107 : vector<8x16x32xf32>
    %109 = vector.extract_strided_slice %100 {offsets = [2, 0, 0], sizes = [8, 16, 32], strides = [1, 1, 1]} : vector<10x16x32xf32> to vector<8x16x32xf32>
    %110 = vector.broadcast %43 : vector<1x1x32xf32> to vector<8x16x32xf32>
    %111 = arith.mulf %109, %110 : vector<8x16x32xf32>
    %112 = arith.addf %108, %111 : vector<8x16x32xf32>
    %113 = vector.extract_strided_slice %97 {offsets = [0, 1, 0], sizes = [10, 16, 32], strides = [1, 1, 1]} : vector<10x18x32xf32> to vector<10x16x32xf32>
    %114 = vector.extract_strided_slice %113 {offsets = [0, 0, 0], sizes = [8, 16, 32], strides = [1, 1, 1]} : vector<10x16x32xf32> to vector<8x16x32xf32>
    %115 = vector.broadcast %28 : vector<1x1x32xf32> to vector<8x16x32xf32>
    %116 = arith.mulf %114, %115 : vector<8x16x32xf32>
    %117 = arith.addf %112, %116 : vector<8x16x32xf32>
    %118 = vector.extract_strided_slice %113 {offsets = [1, 0, 0], sizes = [8, 16, 32], strides = [1, 1, 1]} : vector<10x16x32xf32> to vector<8x16x32xf32>
    %119 = vector.broadcast %51 : vector<1x1x32xf32> to vector<8x16x32xf32>
    %120 = arith.mulf %118, %119 : vector<8x16x32xf32>
    %121 = arith.addf %117, %120 : vector<8x16x32xf32>
    %122 = vector.extract_strided_slice %113 {offsets = [2, 0, 0], sizes = [8, 16, 32], strides = [1, 1, 1]} : vector<10x16x32xf32> to vector<8x16x32xf32>
    %123 = vector.broadcast %46 : vector<1x1x32xf32> to vector<8x16x32xf32>
    %124 = arith.mulf %122, %123 : vector<8x16x32xf32>
    %125 = arith.addf %121, %124 : vector<8x16x32xf32>
    %126 = vector.extract_strided_slice %97 {offsets = [0, 2, 0], sizes = [10, 16, 32], strides = [1, 1, 1]} : vector<10x18x32xf32> to vector<10x16x32xf32>
    %127 = vector.extract_strided_slice %126 {offsets = [0, 0, 0], sizes = [8, 16, 32], strides = [1, 1, 1]} : vector<10x16x32xf32> to vector<8x16x32xf32>
    %128 = vector.broadcast %31 : vector<1x1x32xf32> to vector<8x16x32xf32>
    %129 = arith.mulf %127, %128 : vector<8x16x32xf32>
    %130 = arith.addf %125, %129 : vector<8x16x32xf32>
    %131 = vector.extract_strided_slice %126 {offsets = [1, 0, 0], sizes = [8, 16, 32], strides = [1, 1, 1]} : vector<10x16x32xf32> to vector<8x16x32xf32>
    %132 = vector.broadcast %40 : vector<1x1x32xf32> to vector<8x16x32xf32>
    %133 = arith.mulf %131, %132 : vector<8x16x32xf32>
    %134 = arith.addf %130, %133 : vector<8x16x32xf32>
    %135 = vector.extract_strided_slice %126 {offsets = [2, 0, 0], sizes = [8, 16, 32], strides = [1, 1, 1]} : vector<10x16x32xf32> to vector<8x16x32xf32>
    %136 = vector.broadcast %49 : vector<1x1x32xf32> to vector<8x16x32xf32>
    %137 = arith.mulf %135, %136 : vector<8x16x32xf32>
    %138 = arith.addf %134, %137 : vector<8x16x32xf32>
    %c0_33 = arith.constant 0 : index
    %c8_34 = arith.constant 8 : index
    %c0_35 = arith.constant 0 : index
    %c0_36 = arith.constant 0 : index
    %139 = vector.load %arg7[%c0_33, %c8_34, %c0_35, %c0_36] : memref<1x16x16x32xf32, #tpu.memory_space<vmem>>, vector<1x8x16x32xf32>
    %140 = vector.shape_cast %139 : vector<1x8x16x32xf32> to vector<8x16x32xf32>
    %141 = vector.shape_cast %138 : vector<8x16x32xf32> to vector<1x8x16x32xf32>
    tpu.vector_store %arg7[%c0_33, %c8_34, %c0_35, %c0_36], %141 {strides = array<i32>} : memref<1x16x16x32xf32, #tpu.memory_space<vmem>>, vector<1x8x16x32xf32>,
    return
  }
  func.func @transform_0(%arg0: i32, %arg1: i32) -> (i32, i32, i32, i32) {
    %c0_i32 = arith.constant 0 : i32
    %c0_i32_0 = arith.constant 0 : i32
    %c0_i32_1 = arith.constant 0 : i32
    return %arg0, %arg1, %c0_i32, %c0_i32_0 : i32, i32, i32, i32
  }
  func.func @transform_1(%arg0: i32, %arg1: i32) -> (i32, i32, i32, i32) {
    %c16_i32 = arith.constant 16 : i32
    %0 = arith.muli %arg1, %c16_i32 : i32
    %c1_i32 = arith.constant 1 : i32
    %1 = arith.subi %0, %c1_i32 : i32
    %c0_i32 = arith.constant 0 : i32
    %2 = arith.maxsi %1, %c0_i32 : i32
    %c0_i32_0 = arith.constant 0 : i32
    %c0_i32_1 = arith.constant 0 : i32
    %c0_i32_2 = arith.constant 0 : i32
    return %arg0, %2, %c0_i32_0, %c0_i32_1 : i32, i32, i32, i32
  }
  func.func @transform_2(%arg0: i32, %arg1: i32) -> (i32, i32, i32, i32) {
    %c1_i32 = arith.constant 1 : i32
    %0 = arith.addi %arg1, %c1_i32 : i32
    %c16_i32 = arith.constant 16 : i32
    %1 = arith.muli %0, %c16_i32 : i32
    %c15_i32 = arith.constant 15 : i32
    %2 = arith.minsi %1, %c15_i32 : i32
    %c0_i32 = arith.constant 0 : i32
    %c0_i32_0 = arith.constant 0 : i32
    %c0_i32_1 = arith.constant 0 : i32
    return %arg0, %2, %c0_i32, %c0_i32_0 : i32, i32, i32, i32
  }
  func.func @transform_3(%arg0: i32, %arg1: i32) -> (i32, i32, i32) {
    %c0_i32 = arith.constant 0 : i32
    %c0_i32_0 = arith.constant 0 : i32
    %c0_i32_1 = arith.constant 0 : i32
    %c0_i32_2 = arith.constant 0 : i32
    return %c0_i32, %c0_i32_0, %c0_i32_1 : i32, i32, i32
  }
  func.func @transform_4(%arg0: i32, %arg1: i32) -> (i32, i32) {
    %c0_i32 = arith.constant 0 : i32
    %c0_i32_0 = arith.constant 0 : i32
    %c0_i32_1 = arith.constant 0 : i32
    return %c0_i32, %c0_i32_0 : i32, i32
  }
  func.func @transform_5(%arg0: i32, %arg1: i32) -> (i32, i32, i32, i32) {
    %c0_i32 = arith.constant 0 : i32
    %c0_i32_0 = arith.constant 0 : i32
    %c0_i32_1 = arith.constant 0 : i32
    return %arg0, %arg1, %c0_i32, %c0_i32_0 : i32, i32, i32, i32
  }
}

</mosaic_0001>

<llo_original>
// kernel: tpu_custom_call.1
$region0: #{tpu_custom_call.1}
  #allocation0 [shape = 'u32[]', space=smem, size = 0x4, offset = 0x4, fixed_abs, tag = 'smem constant byte address 0x4 - core index']
  #allocation1 [shape = 'u32[144,128]{1,0:T(1,128)}', space=vmem, size = 0x12000, scoped, tag = 'internal scratch']
  #allocation2 [shape = 'f32[18,18,32]{2,1,0:T(8,128)}', space=vmem, size = 0x36000, scoped, tag = 'scratch operand']
  %s0 = inlined_call_operand.hbm [shape: f32[2,16,16,32], index: 0, kind: input, shape index: {}]
  %s1 = inlined_call_operand.hbm [shape: f32[2,16,16,32], index: 1, kind: input, shape index: {}]
  %s2 = inlined_call_operand.hbm [shape: f32[2,16,16,32], index: 2, kind: input, shape index: {}]
  %s3 = inlined_call_operand.hbm [shape: f32[3,3,32], index: 3, kind: input, shape index: {}]
  %s4 = inlined_call_operand.vmem [shape: f32[1,32], index: 4, kind: input, shape index: {}]
  %s5 = inlined_call_operand.hbm [shape: f32[2,16,16,32], index: 5, kind: output, shape index: {}]
  %s6 = sld [smem:[#allocation0]]
  $region85: #{tpu_custom_call.1} parent=0
    _
  %s8 = ssub.s32 1, %s6
  %s9 = scalar_select 0, %s8, %s6
  $region1: #{tpu_custom_call.1} parent=0
    #allocation3 [shape = 'u8[262144]{0}', space=vmem, size = 0x40000, scoped, tag = 'input window, operand 0']
    #allocation4 [shape = 's32[2]{0}', space=sflag, size = 0x8, scoped, tag = 'scoped memory for tpu_custom_call.1']
    #allocation5 [shape = 's32[2]{0}', space=sflag, size = 0x8, scoped, tag = 'scoped memory for tpu_custom_call.1']
    #allocation6 [shape = 'u8[16384]{0}', space=vmem, size = 0x4000, scoped, tag = 'input window, operand 1']
    #allocation7 [shape = 's32[2]{0}', space=sflag, size = 0x8, scoped, tag = 'scoped memory for tpu_custom_call.1']
    #allocation8 [shape = 'u8[16384]{0}', space=vmem, size = 0x4000, scoped, tag = 'input window, operand 2']
    #allocation9 [shape = 'u8[6144]{0}', space=vmem, size = 0x1800, scoped, tag = 'input window, operand 3, single buffered']
    #allocation10 [shape = 's32[1]{0}', space=sflag, size = 0x4, scoped, tag = 'scoped memory for tpu_custom_call.1']
    #allocation11 [shape = 'u8[262144]{0}', space=vmem, size = 0x40000, scoped, tag = 'output window, operand 0']
    %10 = vsyncpa [#allocation4], 0
    %s11 = scalar_lea.sflag [#allocation4], 1
    %12 = vsyncpa %s11, 0
    %13 = vsyncpa [#allocation7], 0
    %s14 = scalar_lea.sflag [#allocation7], 1
    %15 = vsyncpa %s14, 0
    %16 = vsyncpa [#allocation10], 0
    %17 = vsyncpa [#allocation5], 0
    %s18 = scalar_lea.sflag [#allocation5], 1
    %19 = vsyncpa %s18, 0
    loop: start=0, step=1, limit=4
    $region2: #{tpu_custom_call.1} parent=1 // loop_pre_header
      _
    $region3: #{tpu_custom_call.1} parent=1 // loop_header
      %s21 = sphi 0, %s25
      %p22 = scmp.ge.s32.totalorder %s21, 4
      %s28 = sphi 0, %s40
      %s29 = sphi 0, %s36
      %s30 = sphi 0, %s28
      %s31 = sphi 0, %s29
      %s32 = sphi 0, %s30
      %s33 = sphi 0, %s31
      %s45 = sphi 0, %s47
      %s48 = sphi 0, %s45
      %s49 = sphi 0, %s48
      %s65 = sphi 0, %s49
      %s81 = sphi 0, %s83
      %s84 = sphi 0, %s81
      %s85 = sphi 0, %s84
      %s101 = sphi 0, %s85
      %s117 = sphi 0, %s119
      %s120 = sphi 0, %s117
      %s121 = sphi 0, %s120
      %s137 = sphi 0, %s121
      %s141 = sphi 0, %s141
      %s143 = sphi 0, %s141
      %s144 = sphi 0, %s143
      %s158 = sphi 0, %s144
      %s162 = sphi 0, %s162
      %s164 = sphi 0, %s162
      %s165 = sphi 0, %s164
      %s179 = sphi 0, %s165
      %s187 = sphi 0, %s189
      %s190 = sphi 0, %s187
      %s191 = sphi 0, %s190
      %s207 = sphi 0, %s191
    $region4: #{tpu_custom_call.1} parent=1 // loop_header_branch
      %24 = sbr.rel (%p22) target = $region8
    $region5: #{tpu_custom_call.1} parent=1 // loop_body
      %s26 = ssub.s32 %s21, 1
      %s27 = ssub.s32 %s21, 2
      %s34 = sadd.s32 1, %s29
      %p35 = scmp.ge.s32.totalorder %s34, 1
      %s36 = scalar_select %p35, 0, %s34
      %s37 = sadd.s32 1, %s28
      %s38 = scalar_select %p35, %s37, %s28
      %p39 = scmp.ge.s32.totalorder %s38, 2
      %s40 = scalar_select %p39, 0, %s38
      %s41 = ssub.s32 %s28, %s40
      %s42 = ssub.s32 %s29, %s36
      %s43 = sor.u32 %s41, %s42
      %p44 = scmp.eq.s32.totalorder %s43, 0
      %s46 = sadd.s32 %s45, 1
      %s47 = scalar_select %p44, %s45, %s46
      %p50 = pneg %p44
      %p51 = scmp.eq.s32.totalorder %s21, 1
      %p52 = por %p50, %p51
      %p53 = scmp.ne.s32.totalorder %s45, %s48
      %p54 = scmp.eq.s32.totalorder %s21, 0
      %p55 = por %p53, %p54
      %p56 = scmp.ne.s32.totalorder %s45, %s48
      %p57 = scmp.eq.s32.totalorder %s26, 1
      %p58 = por %p56, %p57
      %p59 = scmp.ne.s32.totalorder %s48, %s49
      %p60 = scmp.eq.s32.totalorder %s26, 0
      %p61 = por %p59, %p60
      %p62 = scmp.ne.s32.totalorder %s48, %s49
      %p63 = scmp.eq.s32.totalorder %s27, 1
      %p64 = por %p62, %p63
      %p66 = scmp.ne.s32.totalorder %s49, %s65
      %p67 = scmp.eq.s32.totalorder %s27, 0
      %p68 = por %p66, %p67
      %s69 = smul.u32 %s29, 16
      %s70 = ssub.s32 %s69, 1
      %p71 = scmp.gt.s32.totalorder %s70, 0
      %s72 = scalar_select %p71, %s70, 0
      %s73 = smul.u32 %s36, 16
      %s74 = ssub.s32 %s73, 1
      %p75 = scmp.gt.s32.totalorder %s74, 0
      %s76 = scalar_select %p75, %s74, 0
      %s77 = ssub.s32 %s28, %s40
      %s78 = ssub.s32 %s72, %s76
      %s79 = sor.u32 %s77, %s78
      %p80 = scmp.eq.s32.totalorder %s79, 0
      %s82 = sadd.s32 %s81, 1
      %s83 = scalar_select %p80, %s81, %s82
      %p86 = pneg %p80
      %p87 = scmp.eq.s32.totalorder %s21, 1
      %p88 = por %p86, %p87
      %p89 = scmp.ne.s32.totalorder %s81, %s84
      %p90 = scmp.eq.s32.totalorder %s21, 0
      %p91 = por %p89, %p90
      %p92 = scmp.ne.s32.totalorder %s81, %s84
      %p93 = scmp.eq.s32.totalorder %s26, 1
      %p94 = por %p92, %p93
      %p95 = scmp.ne.s32.totalorder %s84, %s85
      %p96 = scmp.eq.s32.totalorder %s26, 0
      %p97 = por %p95, %p96
      %p98 = scmp.ne.s32.totalorder %s84, %s85
      %p99 = scmp.eq.s32.totalorder %s27, 1
      %p100 = por %p98, %p99
      %p102 = scmp.ne.s32.totalorder %s85, %s101
      %p103 = scmp.eq.s32.totalorder %s27, 0
      %p104 = por %p102, %p103
      %s105 = sadd.s32 %s29, 1
      %s106 = smul.u32 %s105, 16
      %p107 = scmp.lt.s32.totalorder %s106, 15
      %s108 = scalar_select %p107, %s106, 15
      %s109 = sadd.s32 %s36, 1
      %s110 = smul.u32 %s109, 16
      %p111 = scmp.lt.s32.totalorder %s110, 15
      %s112 = scalar_select %p111, %s110, 15
      %s113 = ssub.s32 %s28, %s40
      %s114 = ssub.s32 %s108, %s112
      %s115 = sor.u32 %s113, %s114
      %p116 = scmp.eq.s32.totalorder %s115, 0
      %s118 = sadd.s32 %s117, 1
      %s119 = scalar_select %p116, %s117, %s118
      %p122 = pneg %p116
      %p123 = scmp.eq.s32.totalorder %s21, 1
      %p124 = por %p122, %p123
      %p125 = scmp.ne.s32.totalorder %s117, %s120
      %p126 = scmp.eq.s32.totalorder %s21, 0
      %p127 = por %p125, %p126
      %p128 = scmp.ne.s32.totalorder %s117, %s120
      %p129 = scmp.eq.s32.totalorder %s26, 1
      %p130 = por %p128, %p129
      %p131 = scmp.ne.s32.totalorder %s120, %s121
      %p132 = scmp.eq.s32.totalorder %s26, 0
      %p133 = por %p131, %p132
      %p134 = scmp.ne.s32.totalorder %s120, %s121
      %p135 = scmp.eq.s32.totalorder %s27, 1
      %p136 = por %p134, %p135
      %p138 = scmp.ne.s32.totalorder %s121, %s137
      %p139 = scmp.eq.s32.totalorder %s27, 0
      %p140 = por %p138, %p139
      %s142 = sadd.s32 %s141, 1
      %p145 = scmp.eq.s32.totalorder %s21, 1
      %p146 = scmp.ne.s32.totalorder %s141, %s143
      %p147 = scmp.eq.s32.totalorder %s21, 0
      %p148 = por %p146, %p147
      %p149 = scmp.ne.s32.totalorder %s141, %s143
      %p150 = scmp.eq.s32.totalorder %s26, 1
      %p151 = por %p149, %p150
      %p152 = scmp.ne.s32.totalorder %s143, %s144
      %p153 = scmp.eq.s32.totalorder %s26, 0
      %p154 = por %p152, %p153
      %p155 = scmp.ne.s32.totalorder %s143, %s144
      %p156 = scmp.eq.s32.totalorder %s27, 1
      %p157 = por %p155, %p156
      %p159 = scmp.ne.s32.totalorder %s144, %s158
      %p160 = scmp.eq.s32.totalorder %s27, 0
      %p161 = por %p159, %p160
      %s163 = sadd.s32 %s162, 1
      %p166 = scmp.eq.s32.totalorder %s21, 1
      %p167 = scmp.ne.s32.totalorder %s162, %s164
      %p168 = scmp.eq.s32.totalorder %s21, 0
      %p169 = por %p167, %p168
      %p170 = scmp.ne.s32.totalorder %s162, %s164
      %p171 = scmp.eq.s32.totalorder %s26, 1
      %p172 = por %p170, %p171
      %p173 = scmp.ne.s32.totalorder %s164, %s165
      %p174 = scmp.eq.s32.totalorder %s26, 0
      %p175 = por %p173, %p174
      %p176 = scmp.ne.s32.totalorder %s164, %s165
      %p177 = scmp.eq.s32.totalorder %s27, 1
      %p178 = por %p176, %p177
      %p180 = scmp.ne.s32.totalorder %s165, %s179
      %p181 = scmp.eq.s32.totalorder %s27, 0
      %p182 = por %p180, %p181
      %s183 = ssub.s32 %s28, %s40
      %s184 = ssub.s32 %s29, %s36
      %s185 = sor.u32 %s183, %s184
      %p186 = scmp.eq.s32.totalorder %s185, 0
      %s188 = sadd.s32 %s187, 1
      %s189 = scalar_select %p186, %s187, %s188
      %p192 = pneg %p186
      %p193 = scmp.eq.s32.totalorder %s21, 1
      %p194 = por %p192, %p193
      %p195 = scmp.ne.s32.totalorder %s187, %s190
      %p196 = scmp.eq.s32.totalorder %s21, 0
      %p197 = por %p195, %p196
      %p198 = scmp.ne.s32.totalorder %s187, %s190
      %p199 = scmp.eq.s32.totalorder %s26, 1
      %p200 = por %p198, %p199
      %p201 = scmp.ne.s32.totalorder %s190, %s191
      %p202 = scmp.eq.s32.totalorder %s26, 0
      %p203 = por %p201, %p202
      %p204 = scmp.ne.s32.totalorder %s190, %s191
      %p205 = scmp.eq.s32.totalorder %s27, 1
      %p206 = por %p204, %p205
      %p208 = scmp.ne.s32.totalorder %s191, %s207
      %p209 = scmp.eq.s32.totalorder %s27, 0
      %p210 = por %p208, %p209
      %p211 = scmp.le.s32.totalorder 1, %s21
      %p212 = scmp.lt.s32.totalorder %s21, 3
      %p213 = pnand %p211, %p212
      %p214 = pneg %p213
      // Predicated region
      $region9: #{tpu_custom_call.1} parent=5 // pred_check
        _
      $region10: #{tpu_custom_call.1} parent=5 // pred_check_branch
        %216 = sbr.rel (%p213) target = $region12
      $region11: #{tpu_custom_call.1} parent=5 // pred_region
        %s217 = ssub.s32 %s21, 1
        // Predicated region
        $region13: #{tpu_custom_call.1} parent=11 // pred_check
          %p218 = pneg %p154
        $region14: #{tpu_custom_call.1} parent=11 // pred_check_branch
          %220 = sbr.rel (%p218) target = $region16
        $region15: #{tpu_custom_call.1} parent=11 // pred_region
          %s222 = ssub.s32 192, 192
          %223 = vsyncadd [#allocation10], %s222
          %s224 = sshll.u32 [#allocation9], 4
          %s225 = int_to_ptr.vmem [resolvable:$true] %s224
          %230 = dma.hbm_to_vmem [thread:$0]  %s3, 192, %s225, [#allocation10], 64, 64, 4
        $region16: #{tpu_custom_call.1} parent=11 // pred_fallthru
          _
        // Predicated region
        $region17: #{tpu_custom_call.1} parent=11 // pred_check
          %p231 = pneg %p175
        $region18: #{tpu_custom_call.1} parent=11 // pred_check_branch
          %233 = sbr.rel (%p231) target = $region20
        $region19: #{tpu_custom_call.1} parent=11 // pred_region
          _
        $region20: #{tpu_custom_call.1} parent=11 // pred_fallthru
          _
      $region12: #{tpu_custom_call.1} parent=5 // pred_fallthru
        _
      %p234 = scmp.lt.s32.totalorder %s21, 2
      // Predicated region
      $region21: #{tpu_custom_call.1} parent=5 // pred_check
        %p235 = pneg %p234
      $region22: #{tpu_custom_call.1} parent=5 // pred_check_branch
        %237 = sbr.rel (%p235) target = $region24
      $region23: #{tpu_custom_call.1} parent=5 // pred_region
        // Predicated region
        $region25: #{tpu_custom_call.1} parent=23 // pred_check
          %p238 = pneg %p55
        $region26: #{tpu_custom_call.1} parent=23 // pred_check_branch
          %240 = sbr.rel (%p238) target = $region28
        $region27: #{tpu_custom_call.1} parent=23 // pred_region
          %s241 = sand.u32 %s45, 1
          %s242 = scalar_lea.sflag [#allocation4], %s241
          %s243 = sand.u32 %s45, 1
          %s244 = smul.addr %s243, 256
          %s245 = scalar_lea.vmem [#allocation3], %s244
          %s246 = smul.u32 16, %s29
          %s248 = ssub.s32 4096, 4096
          %249 = vsyncadd %s242, %s248
          %s250 = smul.addr %s246, 2
          %s251 = smul.addr %s28, 32
          %s252 = sadd.s32 %s250, %s251
          %s253 = smul.addr %s252, 128
          %s254 = scalar_lea.hbm %s0, %s253
          %s255 = sshll.u32 %s245, 4
          %s256 = int_to_ptr.vmem [resolvable:$true] %s255
          %261 = dma.hbm_to_vmem [thread:$0]  %s254, 4096, %s256, %s242, 128, 128, 8
        $region28: #{tpu_custom_call.1} parent=23 // pred_fallthru
          _
        // Predicated region
        $region29: #{tpu_custom_call.1} parent=23 // pred_check
          %p262 = pneg %p91
        $region30: #{tpu_custom_call.1} parent=23 // pred_check_branch
          %264 = sbr.rel (%p262) target = $region32
        $region31: #{tpu_custom_call.1} parent=23 // pred_region
          %s265 = sand.u32 %s21, 1
          %s266 = scalar_lea.sflag [#allocation7], %s265
          %s267 = sand.u32 %s81, 1
          %s268 = smul.addr %s267, 16
          %s269 = scalar_lea.vmem [#allocation6], %s268
          %s270 = smul.u32 %s29, 16
          %s271 = ssub.s32 %s270, 1
          %p272 = scmp.gt.s32.totalorder %s271, 0
          %s273 = scalar_select %p272, %s271, 0
          %s275 = ssub.s32 256, 256
          %276 = vsyncadd %s266, %s275
          %s277 = smul.addr %s273, 2
          %s278 = smul.addr %s28, 32
          %s279 = sadd.s32 %s277, %s278
          %s280 = smul.addr %s279, 128
          %s281 = scalar_lea.hbm %s1, %s280
          %s282 = sshll.u32 %s269, 4
          %s283 = int_to_ptr.vmem [resolvable:$true] %s282
          %288 = dma.hbm_to_vmem [thread:$0]  %s281, 256, %s283, %s266, 128, 128, 8
        $region32: #{tpu_custom_call.1} parent=23 // pred_fallthru
          _
        // Predicated region
        $region33: #{tpu_custom_call.1} parent=23 // pred_check
          %p289 = pneg %p127
        $region34: #{tpu_custom_call.1} parent=23 // pred_check_branch
          %291 = sbr.rel (%p289) target = $region36
        $region35: #{tpu_custom_call.1} parent=23 // pred_region
          %s292 = sand.u32 %s21, 1
          %s293 = scalar_lea.sflag [#allocation7], %s292
          %s294 = sand.u32 %s117, 1
          %s295 = smul.addr %s294, 16
          %s296 = scalar_lea.vmem [#allocation8], %s295
          %s297 = sadd.s32 %s29, 1
          %s298 = smul.u32 %s297, 16
          %p299 = scmp.lt.s32.totalorder %s298, 15
          %s300 = scalar_select %p299, %s298, 15
          %s302 = ssub.s32 256, 256
          %303 = vsyncadd %s293, %s302
          %s304 = smul.addr %s300, 2
          %s305 = smul.addr %s28, 32
          %s306 = sadd.s32 %s304, %s305
          %s307 = smul.addr %s306, 128
          %s308 = scalar_lea.hbm %s2, %s307
          %s309 = sshll.u32 %s296, 4
          %s310 = int_to_ptr.vmem [resolvable:$true] %s309
          %315 = dma.hbm_to_vmem [thread:$0]  %s308, 256, %s310, %s293, 128, 128, 8
        $region36: #{tpu_custom_call.1} parent=23 // pred_fallthru
          _
      $region24: #{tpu_custom_call.1} parent=5 // pred_fallthru
        _
      %p316 = scmp.le.s32.totalorder 1, %s21
      %p317 = scmp.lt.s32.totalorder %s21, 3
      %p318 = pnand %p316, %p317
      %p319 = pneg %p318
      // Predicated region
      $region37: #{tpu_custom_call.1} parent=5 // pred_check
        _
      $region38: #{tpu_custom_call.1} parent=5 // pred_check_branch
        %321 = sbr.rel (%p318) target = $region40
      $region39: #{tpu_custom_call.1} parent=5 // pred_region
        %s322 = ssub.s32 %s21, 1
        %s323 = sand.u32 %s48, 1
        %s324 = scalar_lea.sflag [#allocation4], %s323
        %s325 = sand.u32 %s48, 1
        %s326 = smul.addr %s325, 256
        %s327 = scalar_lea.vmem [#allocation3], %s326
        // Predicated region
        $region41: #{tpu_custom_call.1} parent=39 // pred_check
          %p328 = pneg %p61
        $region42: #{tpu_custom_call.1} parent=39 // pred_check_branch
          %330 = sbr.rel (%p328) target = $region44
        $region43: #{tpu_custom_call.1} parent=39 // pred_region
          %331 = dma.done %s324, 4096
        $region44: #{tpu_custom_call.1} parent=39 // pred_fallthru
          _
        %s332 = sand.u32 %s26, 1
        %s333 = scalar_lea.sflag [#allocation7], %s332
        %s334 = sand.u32 %s84, 1
        %s335 = smul.addr %s334, 16
        %s336 = scalar_lea.vmem [#allocation6], %s335
        // Predicated region
        $region45: #{tpu_custom_call.1} parent=39 // pred_check
          %p337 = pneg %p97
        $region46: #{tpu_custom_call.1} parent=39 // pred_check_branch
          %339 = sbr.rel (%p337) target = $region48
        $region47: #{tpu_custom_call.1} parent=39 // pred_region
          %340 = dma.done %s333, 256
        $region48: #{tpu_custom_call.1} parent=39 // pred_fallthru
          _
        %s341 = sand.u32 %s26, 1
        %s342 = scalar_lea.sflag [#allocation7], %s341
        %s343 = sand.u32 %s120, 1
        %s344 = smul.addr %s343, 16
        %s345 = scalar_lea.vmem [#allocation8], %s344
        // Predicated region
        $region49: #{tpu_custom_call.1} parent=39 // pred_check
          %p346 = pneg %p133
        $region50: #{tpu_custom_call.1} parent=39 // pred_check_branch
          %348 = sbr.rel (%p346) target = $region52
        $region51: #{tpu_custom_call.1} parent=39 // pred_region
          %349 = dma.done %s342, 256
        $region52: #{tpu_custom_call.1} parent=39 // pred_fallthru
          _
        // Predicated region
        $region53: #{tpu_custom_call.1} parent=39 // pred_check
          %p350 = pneg %p154
        $region54: #{tpu_custom_call.1} parent=39 // pred_check_branch
          %352 = sbr.rel (%p350) target = $region56
        $region55: #{tpu_custom_call.1} parent=39 // pred_region
          %353 = dma.done [#allocation10], 192
        $region56: #{tpu_custom_call.1} parent=39 // pred_fallthru
          _
        %s354 = sand.u32 %s48, 1
        %s355 = scalar_lea.sflag [#allocation4], %s354
        %s356 = sand.u32 %s48, 1
        %s357 = smul.addr %s356, 256
        %s358 = scalar_lea.vmem [#allocation3], %s357
        %p359 = pneg %p61
        %p360 = pneg %p58
        %s361 = sand.u32 %s26, 1
        %s362 = scalar_lea.sflag [#allocation7], %s361
        %s363 = sand.u32 %s84, 1
        %s364 = smul.addr %s363, 16
        %s365 = scalar_lea.vmem [#allocation6], %s364
        %p366 = pneg %p97
        %p367 = pneg %p94
        %s368 = sand.u32 %s26, 1
        %s369 = scalar_lea.sflag [#allocation7], %s368
        %s370 = sand.u32 %s120, 1
        %s371 = smul.addr %s370, 16
        %s372 = scalar_lea.vmem [#allocation8], %s371
        %p373 = pneg %p133
        %p374 = pneg %p130
        %p375 = pneg %p154
        %p376 = pneg %p151
        %p377 = pneg %p175
        %p378 = pneg %p172
        %p379 = pneg %p203
        %p380 = pneg %p200
        %s381 = sand.u32 %s190, 1
        %s382 = scalar_lea.sflag [#allocation5], %s381
        %s383 = sand.u32 %s190, 1
        %s384 = smul.addr %s383, 256
        %s385 = scalar_lea.vmem [#allocation11], %s384
        %s386 = smul.u32 16, %s31
        %s387 = smul.u32 %s31, 16
        %s388 = ssub.s32 %s387, 1
        %p389 = scmp.gt.s32.totalorder %s388, 0
        %s390 = scalar_select %p389, %s388, 0
        %s391 = sadd.s32 %s31, 1
        %s392 = smul.u32 %s391, 16
        %p393 = scmp.lt.s32.totalorder %s392, 15
        %s394 = scalar_select %p393, %s392, 15
        %s395 = smul.u32 16, %s31
        %vm396 = vcmask 253952
        %397 = vst.msk [vmem:[#allocation2] sm:$0x1] %vm396, 0.0
        %398 = vst.msk [vmem:[#allocation2 + $0x18] sm:$0x1] %vm396, 0.0
        %399 = vst.msk [vmem:[#allocation2 + $0x30] sm:$0x1] %vm396, 0.0
        %400 = vst.msk [vmem:[#allocation2 + $0x48] sm:$0x1] %vm396, 0.0
        %401 = vst.msk [vmem:[#allocation2 + $0x60] sm:$0x1] %vm396, 0.0
        %402 = vst.msk [vmem:[#allocation2 + $0x78] sm:$0x1] %vm396, 0.0
        %403 = vst.msk [vmem:[#allocation2 + $0x90] sm:$0x1] %vm396, 0.0
        %404 = vst.msk [vmem:[#allocation2 + $0xa8] sm:$0x1] %vm396, 0.0
        %405 = vst.msk [vmem:[#allocation2 + $0xc0] sm:$0x1] %vm396, 0.0
        %406 = vst.msk [vmem:[#allocation2 + $0xd8] sm:$0x1] %vm396, 0.0
        %407 = vst.msk [vmem:[#allocation2 + $0xf0] sm:$0x1] %vm396, 0.0
        %408 = vst.msk [vmem:[#allocation2 + $0x108] sm:$0x1] %vm396, 0.0
        %409 = vst.msk [vmem:[#allocation2 + $0x120] sm:$0x1] %vm396, 0.0
        %410 = vst.msk [vmem:[#allocation2 + $0x138] sm:$0x1] %vm396, 0.0
        %411 = vst.msk [vmem:[#allocation2 + $0x150] sm:$0x1] %vm396, 0.0
        %412 = vst.msk [vmem:[#allocation2 + $0x168] sm:$0x1] %vm396, 0.0
        %413 = vst.msk [vmem:[#allocation2 + $0x180] sm:$0x1] %vm396, 0.0
        %414 = vst.msk [vmem:[#allocation2 + $0x198] sm:$0x1] %vm396, 0.0
        %415 = vst.msk [vmem:[#allocation2 + $0x11] sm:$0x1] %vm396, 0.0
        %416 = vst.msk [vmem:[#allocation2 + $0x29] sm:$0x1] %vm396, 0.0
        %417 = vst.msk [vmem:[#allocation2 + $0x41] sm:$0x1] %vm396, 0.0
        %418 = vst.msk [vmem:[#allocation2 + $0x59] sm:$0x1] %vm396, 0.0
        %419 = vst.msk [vmem:[#allocation2 + $0x71] sm:$0x1] %vm396, 0.0
        %420 = vst.msk [vmem:[#allocation2 + $0x89] sm:$0x1] %vm396, 0.0
        %421 = vst.msk [vmem:[#allocation2 + $0xa1] sm:$0x1] %vm396, 0.0
        %422 = vst.msk [vmem:[#allocation2 + $0xb9] sm:$0x1] %vm396, 0.0
        %423 = vst.msk [vmem:[#allocation2 + $0xd1] sm:$0x1] %vm396, 0.0
        %424 = vst.msk [vmem:[#allocation2 + $0xe9] sm:$0x1] %vm396, 0.0
        %425 = vst.msk [vmem:[#allocation2 + $0x101] sm:$0x1] %vm396, 0.0
        %426 = vst.msk [vmem:[#allocation2 + $0x119] sm:$0x1] %vm396, 0.0
        %427 = vst.msk [vmem:[#allocation2 + $0x131] sm:$0x1] %vm396, 0.0
        %428 = vst.msk [vmem:[#allocation2 + $0x149] sm:$0x1] %vm396, 0.0
        %429 = vst.msk [vmem:[#allocation2 + $0x161] sm:$0x1] %vm396, 0.0
        %430 = vst.msk [vmem:[#allocation2 + $0x179] sm:$0x1] %vm396, 0.0
        %431 = vst.msk [vmem:[#allocation2 + $0x191] sm:$0x1] %vm396, 0.0
        %432 = vst.msk [vmem:[#allocation2 + $0x1a9] sm:$0x1] %vm396, 0.0
        %v433 = vld [vmem:[%s327] sm:$0xff]
        %v434 = vld [vmem:[%s327 + $0x8] sm:$0xff]
        %v435 = vld [vmem:[%s327 + $0x10] sm:$0xff]
        %v436 = vld [vmem:[%s327 + $0x18] sm:$0xff]
        %v437 = vld [vmem:[%s327 + $0x20] sm:$0xff]
        %v438 = vld [vmem:[%s327 + $0x28] sm:$0xff]
        %v439 = vld [vmem:[%s327 + $0x30] sm:$0xff]
        %v440 = vld [vmem:[%s327 + $0x38] sm:$0xff]
        %v441 = vld [vmem:[%s327 + $0x40] sm:$0xff]
        %v442 = vld [vmem:[%s327 + $0x48] sm:$0xff]
        %v443 = vld [vmem:[%s327 + $0x50] sm:$0xff]
        %v444 = vld [vmem:[%s327 + $0x58] sm:$0xff]
        %v445 = vld [vmem:[%s327 + $0x60] sm:$0xff]
        %v446 = vld [vmem:[%s327 + $0x68] sm:$0xff]
        %v447 = vld [vmem:[%s327 + $0x70] sm:$0xff]
        %v448 = vld [vmem:[%s327 + $0x78] sm:$0xff]
        %v449 = vld [vmem:[%s327 + $0x80] sm:$0xff]
        %v450 = vld [vmem:[%s327 + $0x88] sm:$0xff]
        %v451 = vld [vmem:[%s327 + $0x90] sm:$0xff]
        %v452 = vld [vmem:[%s327 + $0x98] sm:$0xff]
        %v453 = vld [vmem:[%s327 + $0xa0] sm:$0xff]
        %v454 = vld [vmem:[%s327 + $0xa8] sm:$0xff]
        %v455 = vld [vmem:[%s327 + $0xb0] sm:$0xff]
        %v456 = vld [vmem:[%s327 + $0xb8] sm:$0xff]
        %v457 = vld [vmem:[%s327 + $0xc0] sm:$0xff]
        %v458 = vld [vmem:[%s327 + $0xc8] sm:$0xff]
        %v459 = vld [vmem:[%s327 + $0xd0] sm:$0xff]
        %v460 = vld [vmem:[%s327 + $0xd8] sm:$0xff]
        %v461 = vld [vmem:[%s327 + $0xe0] sm:$0xff]
        %v462 = vld [vmem:[%s327 + $0xe8] sm:$0xff]
        %v463 = vld [vmem:[%s327 + $0xf0] sm:$0xff]
        %v464 = vld [vmem:[%s327 + $0xf8] sm:$0xff]
        %s465 = scalar_lea.vmem [#allocation2], 24
        %vm466 = vcmask 261120
        %467 = vst.msk [vmem:[%s465 + $0x1] sm:$0xff] %vm466, %v433
        %468 = vst.msk [vmem:[%s465 + $0x9] sm:$0xff] %vm466, %v434
        %469 = vst.msk [vmem:[%s465 + $0x19] sm:$0xff] %vm466, %v435
        %470 = vst.msk [vmem:[%s465 + $0x21] sm:$0xff] %vm466, %v436
        %471 = vst.msk [vmem:[%s465 + $0x31] sm:$0xff] %vm466, %v437
        %472 = vst.msk [vmem:[%s465 + $0x39] sm:$0xff] %vm466, %v438
        %473 = vst.msk [vmem:[%s465 + $0x49] sm:$0xff] %vm466, %v439
        %474 = vst.msk [vmem:[%s465 + $0x51] sm:$0xff] %vm466, %v440
        %475 = vst.msk [vmem:[%s465 + $0x61] sm:$0xff] %vm466, %v441
        %476 = vst.msk [vmem:[%s465 + $0x69] sm:$0xff] %vm466, %v442
        %477 = vst.msk [vmem:[%s465 + $0x79] sm:$0xff] %vm466, %v443
        %478 = vst.msk [vmem:[%s465 + $0x81] sm:$0xff] %vm466, %v444
        %479 = vst.msk [vmem:[%s465 + $0x91] sm:$0xff] %vm466, %v445
        %480 = vst.msk [vmem:[%s465 + $0x99] sm:$0xff] %vm466, %v446
        %481 = vst.msk [vmem:[%s465 + $0xa9] sm:$0xff] %vm466, %v447
        %482 = vst.msk [vmem:[%s465 + $0xb1] sm:$0xff] %vm466, %v448
        %483 = vst.msk [vmem:[%s465 + $0xc1] sm:$0xff] %vm466, %v449
        %484 = vst.msk [vmem:[%s465 + $0xc9] sm:$0xff] %vm466, %v450
        %485 = vst.msk [vmem:[%s465 + $0xd9] sm:$0xff] %vm466, %v451
        %486 = vst.msk [vmem:[%s465 + $0xe1] sm:$0xff] %vm466, %v452
        %487 = vst.msk [vmem:[%s465 + $0xf1] sm:$0xff] %vm466, %v453
        %488 = vst.msk [vmem:[%s465 + $0xf9] sm:$0xff] %vm466, %v454
        %489 = vst.msk [vmem:[%s465 + $0x109] sm:$0xff] %vm466, %v455
        %490 = vst.msk [vmem:[%s465 + $0x111] sm:$0xff] %vm466, %v456
        %491 = vst.msk [vmem:[%s465 + $0x121] sm:$0xff] %vm466, %v457
        %492 = vst.msk [vmem:[%s465 + $0x129] sm:$0xff] %vm466, %v458
        %493 = vst.msk [vmem:[%s465 + $0x139] sm:$0xff] %vm466, %v459
        %494 = vst.msk [vmem:[%s465 + $0x141] sm:$0xff] %vm466, %v460
        %495 = vst.msk [vmem:[%s465 + $0x151] sm:$0xff] %vm466, %v461
        %496 = vst.msk [vmem:[%s465 + $0x159] sm:$0xff] %vm466, %v462
        %497 = vst.msk [vmem:[%s465 + $0x169] sm:$0xff] %vm466, %v463
        %498 = vst.msk [vmem:[%s465 + $0x171] sm:$0xff] %vm466, %v464
        %p499 = scmp.eq.s32.totalorder %s31, 0
        // Predicated region
        $region57: #{tpu_custom_call.1} parent=39 // pred_check
          %p500 = pneg %p499
        $region58: #{tpu_custom_call.1} parent=39 // pred_check_branch
          %502 = sbr.rel (%p500) target = $region60
        $region59: #{tpu_custom_call.1} parent=39 // pred_region
          %503 = vst.msk [vmem:[#allocation2 + $0x1] sm:$0xff] %vm466, 0.0
          %504 = vst.msk [vmem:[#allocation2 + $0x9] sm:$0xff] %vm466, 0.0
        $region60: #{tpu_custom_call.1} parent=39 // pred_fallthru
          _
        %p505 = scmp.gt.s32.totalorder %s31, 0
        // Predicated region
        $region61: #{tpu_custom_call.1} parent=39 // pred_check
          %p506 = pneg %p505
        $region62: #{tpu_custom_call.1} parent=39 // pred_check_branch
          %508 = sbr.rel (%p506) target = $region64
        $region63: #{tpu_custom_call.1} parent=39 // pred_region
          %v509 = vld [vmem:[%s336] sm:$0xff]
          %v510 = vld [vmem:[%s336 + $0x8] sm:$0xff]
          %511 = vst.msk [vmem:[#allocation2 + $0x1] sm:$0xff] %vm466, %v509
          %512 = vst.msk [vmem:[#allocation2 + $0x9] sm:$0xff] %vm466, %v510
        $region64: #{tpu_custom_call.1} parent=39 // pred_fallthru
          _
        // Predicated region
        $region65: #{tpu_custom_call.1} parent=39 // pred_check
          %p513 = pneg %p499
        $region66: #{tpu_custom_call.1} parent=39 // pred_check_branch
          %515 = sbr.rel (%p513) target = $region68
        $region67: #{tpu_custom_call.1} parent=39 // pred_region
          %s516 = scalar_lea.vmem [#allocation2], 408
          %517 = vst.msk [vmem:[%s516 + $0x1] sm:$0xff] %vm466, 0.0
          %518 = vst.msk [vmem:[%s516 + $0x9] sm:$0xff] %vm466, 0.0
        $region68: #{tpu_custom_call.1} parent=39 // pred_fallthru
          _
        %p519 = scmp.lt.s32.totalorder %s31, 0
        // Predicated region
        $region69: #{tpu_custom_call.1} parent=39 // pred_check
          %p520 = pneg %p519
        $region70: #{tpu_custom_call.1} parent=39 // pred_check_branch
          %522 = sbr.rel (%p520) target = $region72
        $region71: #{tpu_custom_call.1} parent=39 // pred_region
          %v523 = vld [vmem:[%s345] sm:$0xff]
          %v524 = vld [vmem:[%s345 + $0x8] sm:$0xff]
          %s525 = scalar_lea.vmem [#allocation2], 408
          %526 = vst.msk [vmem:[%s525 + $0x1] sm:$0xff] %vm466, %v523
          %527 = vst.msk [vmem:[%s525 + $0x9] sm:$0xff] %vm466, %v524
        $region72: #{tpu_custom_call.1} parent=39 // pred_fallthru
          _
        %v528 = vld [vmem:[#allocation9] sm:$0x7]
        %v529 = vld [vmem:[#allocation9 + $0x4] sm:$0x7]
        %v530 = vld [vmem:[#allocation9 + $0x8] sm:$0x7]
        %v531 = vld [vmem:[%s4] sm:$0x1]
        %v532 = vadd.f32 %v529, 1.0
        %v533 = vld [vmem:[#allocation2] sm:$0xff]
        %v534 = vld [vmem:[#allocation2 + $0x8] sm:$0xff]
        %v535 = vld [vmem:[#allocation2 + $0x10] sm:$0x3]
        %v536 = vld [vmem:[#allocation2 + $0x18] sm:$0xff]
        %v537 = vld [vmem:[#allocation2 + $0x20] sm:$0xff]
        %v538 = vld [vmem:[#allocation2 + $0x28] sm:$0x3]
        %v539 = vld [vmem:[#allocation2 + $0x30] sm:$0xff]
        %v540 = vld [vmem:[#allocation2 + $0x38] sm:$0xff]
        %v541 = vld [vmem:[#allocation2 + $0x40] sm:$0x3]
        %v542 = vld [vmem:[#allocation2 + $0x48] sm:$0xff]
        %v543 = vld [vmem:[#allocation2 + $0x50] sm:$0xff]
        %v544 = vld [vmem:[#allocation2 + $0x58] sm:$0x3]
        %v545 = vld [vmem:[#allocation2 + $0x60] sm:$0xff]
        %v546 = vld [vmem:[#allocation2 + $0x68] sm:$0xff]
        %v547 = vld [vmem:[#allocation2 + $0x70] sm:$0x3]
        %v548 = vld [vmem:[#allocation2 + $0x78] sm:$0xff]
        %v549 = vld [vmem:[#allocation2 + $0x80] sm:$0xff]
        %v550 = vld [vmem:[#allocation2 + $0x88] sm:$0x3]
        %v551 = vld [vmem:[#allocation2 + $0x90] sm:$0xff]
        %v552 = vld [vmem:[#allocation2 + $0x98] sm:$0xff]
        %v553 = vld [vmem:[#allocation2 + $0xa0] sm:$0x3]
        %v554 = vld [vmem:[#allocation2 + $0xa8] sm:$0xff]
        %v555 = vld [vmem:[#allocation2 + $0xb0] sm:$0xff]
        %v556 = vld [vmem:[#allocation2 + $0xb8] sm:$0x3]
        %v557 = vld [vmem:[#allocation2 + $0xc0] sm:$0xff]
        %v558 = vld [vmem:[#allocation2 + $0xc8] sm:$0xff]
        %v559 = vld [vmem:[#allocation2 + $0xd0] sm:$0x3]
        %v560 = vld [vmem:[#allocation2 + $0xd8] sm:$0xff]
        %v561 = vld [vmem:[#allocation2 + $0xe0] sm:$0xff]
        %v562 = vld [vmem:[#allocation2 + $0xe8] sm:$0x3]
        %v564 = vlaneseq
        %v565 = vshrl.u32 %v564, 7
        %v566 = vsub.s32 0, %v565
        %v567 = vrot.slane %v531, %v566
        %v569 = vlaneseq
        %v570 = vshrl.u32 %v569, 7
        %v571 = vsub.s32 0, %v570
        %v572 = vrot.slane %v528, %v571
        %v573 = vmul.f32 %v533, %v572
        %v574 = vmul.f32 %v534, %v572
        %v575 = vmul.f32 %v536, %v572
        %v576 = vmul.f32 %v537, %v572
        %v577 = vmul.f32 %v539, %v572
        %v578 = vmul.f32 %v540, %v572
        %v579 = vmul.f32 %v542, %v572
        %v580 = vmul.f32 %v543, %v572
        %v581 = vmul.f32 %v545, %v572
        %v582 = vmul.f32 %v546, %v572
        %v583 = vmul.f32 %v548, %v572
        %v584 = vmul.f32 %v549, %v572
        %v585 = vmul.f32 %v551, %v572
        %v586 = vmul.f32 %v552, %v572
        %v587 = vmul.f32 %v554, %v572
        %v588 = vmul.f32 %v555, %v572
        %v589 = vadd.f32 %v567, %v573
        %v590 = vadd.f32 %v567, %v574
        %v591 = vadd.f32 %v567, %v575
        %v592 = vadd.f32 %v567, %v576
        %v593 = vadd.f32 %v567, %v577
        %v594 = vadd.f32 %v567, %v578
        %v595 = vadd.f32 %v567, %v579
        %v596 = vadd.f32 %v567, %v580
        %v597 = vadd.f32 %v567, %v581
        %v598 = vadd.f32 %v567, %v582
        %v599 = vadd.f32 %v567, %v583
        %v600 = vadd.f32 %v567, %v584
        %v601 = vadd.f32 %v567, %v585
        %v602 = vadd.f32 %v567, %v586
        %v603 = vadd.f32 %v567, %v587
        %v604 = vadd.f32 %v567, %v588
        %v605 = vlaneseq
        %v606 = vshrl.u32 %v605, 7
        %v607 = vsub.s32 0, %v606
        %v608 = vrot.slane %v529, %v607
        %v609 = vmul.f32 %v536, %v608
        %v610 = vmul.f32 %v537, %v608
        %v611 = vmul.f32 %v539, %v608
        %v612 = vmul.f32 %v540, %v608
        %v613 = vmul.f32 %v542, %v608
        %v614 = vmul.f32 %v543, %v608
        %v615 = vmul.f32 %v545, %v608
        %v616 = vmul.f32 %v546, %v608
        %v617 = vmul.f32 %v548, %v608
        %v618 = vmul.f32 %v549, %v608
        %v619 = vmul.f32 %v551, %v608
        %v620 = vmul.f32 %v552, %v608
        %v621 = vmul.f32 %v554, %v608
        %v622 = vmul.f32 %v555, %v608
        %v623 = vmul.f32 %v557, %v608
        %v624 = vmul.f32 %v558, %v608
        %v625 = vadd.f32 %v589, %v609
        %v626 = vadd.f32 %v590, %v610
        %v627 = vadd.f32 %v591, %v611
        %v628 = vadd.f32 %v592, %v612
        %v629 = vadd.f32 %v593, %v613
        %v630 = vadd.f32 %v594, %v614
        %v631 = vadd.f32 %v595, %v615
        %v632 = vadd.f32 %v596, %v616
        %v633 = vadd.f32 %v597, %v617
        %v634 = vadd.f32 %v598, %v618
        %v635 = vadd.f32 %v599, %v619
        %v636 = vadd.f32 %v600, %v620
        %v637 = vadd.f32 %v601, %v621
        %v638 = vadd.f32 %v602, %v622
        %v639 = vadd.f32 %v603, %v623
        %v640 = vadd.f32 %v604, %v624
        %v641 = vlaneseq
        %v642 = vshrl.u32 %v641, 7
        %v643 = vsub.s32 0, %v642
        %v644 = vrot.slane %v530, %v643
        %v645 = vmul.f32 %v539, %v644
        %v646 = vmul.f32 %v540, %v644
        %v647 = vmul.f32 %v542, %v644
        %v648 = vmul.f32 %v543, %v644
        %v649 = vmul.f32 %v545, %v644
        %v650 = vmul.f32 %v546, %v644
        %v651 = vmul.f32 %v548, %v644
        %v652 = vmul.f32 %v549, %v644
        %v653 = vmul.f32 %v551, %v644
        %v654 = vmul.f32 %v552, %v644
        %v655 = vmul.f32 %v554, %v644
        %v656 = vmul.f32 %v555, %v644
        %v657 = vmul.f32 %v557, %v644
        %v658 = vmul.f32 %v558, %v644
        %v659 = vmul.f32 %v560, %v644
        %v660 = vmul.f32 %v561, %v644
        %v661 = vadd.f32 %v625, %v645
        %v662 = vadd.f32 %v626, %v646
        %v663 = vadd.f32 %v627, %v647
        %v664 = vadd.f32 %v628, %v648
        %v665 = vadd.f32 %v629, %v649
        %v666 = vadd.f32 %v630, %v650
        %v667 = vadd.f32 %v631, %v651
        %v668 = vadd.f32 %v632, %v652
        %v669 = vadd.f32 %v633, %v653
        %v670 = vadd.f32 %v634, %v654
        %v671 = vadd.f32 %v635, %v655
        %v672 = vadd.f32 %v636, %v656
        %v673 = vadd.f32 %v637, %v657
        %v674 = vadd.f32 %v638, %v658
        %v675 = vadd.f32 %v639, %v659
        %v676 = vadd.f32 %v640, %v660
        %v677 = vlaneseq
        %v678 = vshrl.u32 %v677, 7
        %v679 = vsub.s32 1, %v678
        %v680 = vrot.slane %v528, %v679
        %v681 = vmul.f32 %v533, %v680
        %v682 = vmul.f32 %v534, %v680
        %v683 = vmul.f32 %v535, %v680
        %v684 = vmul.f32 %v536, %v680
        %v685 = vmul.f32 %v537, %v680
        %v686 = vmul.f32 %v538, %v680
        %v687 = vmul.f32 %v539, %v680
        %v688 = vmul.f32 %v540, %v680
        %v689 = vmul.f32 %v541, %v680
        %v690 = vmul.f32 %v542, %v680
        %v691 = vmul.f32 %v543, %v680
        %v692 = vmul.f32 %v544, %v680
        %v693 = vmul.f32 %v545, %v680
        %v694 = vmul.f32 %v546, %v680
        %v695 = vmul.f32 %v547, %v680
        %v696 = vmul.f32 %v548, %v680
        %v697 = vmul.f32 %v549, %v680
        %v698 = vmul.f32 %v550, %v680
        %v699 = vmul.f32 %v551, %v680
        %v700 = vmul.f32 %v552, %v680
        %v701 = vmul.f32 %v553, %v680
        %v702 = vmul.f32 %v554, %v680
        %v703 = vmul.f32 %v555, %v680
        %v704 = vmul.f32 %v556, %v680
        %vm729 = vcmask 1046528
        %v730 = vrot.slane %v681, 1
        %v731 = vrot.slane %v682, 1
        %v732 = vsel %vm729, %v730, %v731
        %v733 = vrot.slane %v683, 1
        %v734 = vsel %vm729, %v731, %v733
        %v735 = vrot.slane %v684, 1
        %v736 = vrot.slane %v685, 1
        %v737 = vsel %vm729, %v735, %v736
        %v738 = vrot.slane %v686, 1
        %v739 = vsel %vm729, %v736, %v738
        %v740 = vrot.slane %v687, 1
        %v741 = vrot.slane %v688, 1
        %v742 = vsel %vm729, %v740, %v741
        %v743 = vrot.slane %v689, 1
        %v744 = vsel %vm729, %v741, %v743
        %v745 = vrot.slane %v690, 1
        %v746 = vrot.slane %v691, 1
        %v747 = vsel %vm729, %v745, %v746
        %v748 = vrot.slane %v692, 1
        %v749 = vsel %vm729, %v746, %v748
        %v750 = vrot.slane %v693, 1
        %v751 = vrot.slane %v694, 1
        %v752 = vsel %vm729, %v750, %v751
        %v753 = vrot.slane %v695, 1
        %v754 = vsel %vm729, %v751, %v753
        %v755 = vrot.slane %v696, 1
        %v756 = vrot.slane %v697, 1
        %v757 = vsel %vm729, %v755, %v756
        %v758 = vrot.slane %v698, 1
        %v759 = vsel %vm729, %v756, %v758
        %v760 = vrot.slane %v699, 1
        %v761 = vrot.slane %v700, 1
        %v762 = vsel %vm729, %v760, %v761
        %v763 = vrot.slane %v701, 1
        %v764 = vsel %vm729, %v761, %v763
        %v765 = vrot.slane %v702, 1
        %v766 = vrot.slane %v703, 1
        %v767 = vsel %vm729, %v765, %v766
        %v768 = vrot.slane %v704, 1
        %v769 = vsel %vm729, %v766, %v768
        %v786 = vadd.f32 %v661, %v732
        %v787 = vadd.f32 %v662, %v734
        %v788 = vadd.f32 %v663, %v737
        %v789 = vadd.f32 %v664, %v739
        %v790 = vadd.f32 %v665, %v742
        %v791 = vadd.f32 %v666, %v744
        %v792 = vadd.f32 %v667, %v747
        %v793 = vadd.f32 %v668, %v749
        %v794 = vadd.f32 %v669, %v752
        %v795 = vadd.f32 %v670, %v754
        %v796 = vadd.f32 %v671, %v757
        %v797 = vadd.f32 %v672, %v759
        %v798 = vadd.f32 %v673, %v762
        %v799 = vadd.f32 %v674, %v764
        %v800 = vadd.f32 %v675, %v767
        %v801 = vadd.f32 %v676, %v769
        %v802 = vlaneseq
        %v803 = vshrl.u32 %v802, 7
        %v804 = vsub.s32 1, %v803
        %v805 = vrot.slane %v532, %v804
        %v806 = vmul.f32 %v536, %v805
        %v807 = vmul.f32 %v537, %v805
        %v808 = vmul.f32 %v538, %v805
        %v809 = vmul.f32 %v539, %v805
        %v810 = vmul.f32 %v540, %v805
        %v811 = vmul.f32 %v541, %v805
        %v812 = vmul.f32 %v542, %v805
        %v813 = vmul.f32 %v543, %v805
        %v814 = vmul.f32 %v544, %v805
        %v815 = vmul.f32 %v545, %v805
        %v816 = vmul.f32 %v546, %v805
        %v817 = vmul.f32 %v547, %v805
        %v818 = vmul.f32 %v548, %v805
        %v819 = vmul.f32 %v549, %v805
        %v820 = vmul.f32 %v550, %v805
        %v821 = vmul.f32 %v551, %v805
        %v822 = vmul.f32 %v552, %v805
        %v823 = vmul.f32 %v553, %v805
        %v824 = vmul.f32 %v554, %v805
        %v825 = vmul.f32 %v555, %v805
        %v826 = vmul.f32 %v556, %v805
        %v827 = vmul.f32 %v557, %v805
        %v828 = vmul.f32 %v558, %v805
        %v829 = vmul.f32 %v559, %v805
        %v854 = vrot.slane %v806, 1
        %v855 = vrot.slane %v807, 1
        %v856 = vsel %vm729, %v854, %v855
        %v857 = vrot.slane %v808, 1
        %v858 = vsel %vm729, %v855, %v857
        %v859 = vrot.slane %v809, 1
        %v860 = vrot.slane %v810, 1
        %v861 = vsel %vm729, %v859, %v860
        %v862 = vrot.slane %v811, 1
        %v863 = vsel %vm729, %v860, %v862
        %v864 = vrot.slane %v812, 1
        %v865 = vrot.slane %v813, 1
        %v866 = vsel %vm729, %v864, %v865
        %v867 = vrot.slane %v814, 1
        %v868 = vsel %vm729, %v865, %v867
        %v869 = vrot.slane %v815, 1
        %v870 = vrot.slane %v816, 1
        %v871 = vsel %vm729, %v869, %v870
        %v872 = vrot.slane %v817, 1
        %v873 = vsel %vm729, %v870, %v872
        %v874 = vrot.slane %v818, 1
        %v875 = vrot.slane %v819, 1
        %v876 = vsel %vm729, %v874, %v875
        %v877 = vrot.slane %v820, 1
        %v878 = vsel %vm729, %v875, %v877
        %v879 = vrot.slane %v821, 1
        %v880 = vrot.slane %v822, 1
        %v881 = vsel %vm729, %v879, %v880
        %v882 = vrot.slane %v823, 1
        %v883 = vsel %vm729, %v880, %v882
        %v884 = vrot.slane %v824, 1
        %v885 = vrot.slane %v825, 1
        %v886 = vsel %vm729, %v884, %v885
        %v887 = vrot.slane %v826, 1
        %v888 = vsel %vm729, %v885, %v887
        %v889 = vrot.slane %v827, 1
        %v890 = vrot.slane %v828, 1
        %v891 = vsel %vm729, %v889, %v890
        %v892 = vrot.slane %v829, 1
        %v893 = vsel %vm729, %v890, %v892
        %v910 = vadd.f32 %v786, %v856
        %v911 = vadd.f32 %v787, %v858
        %v912 = vadd.f32 %v788, %v861
        %v913 = vadd.f32 %v789, %v863
        %v914 = vadd.f32 %v790, %v866
        %v915 = vadd.f32 %v791, %v868
        %v916 = vadd.f32 %v792, %v871
        %v917 = vadd.f32 %v793, %v873
        %v918 = vadd.f32 %v794, %v876
        %v919 = vadd.f32 %v795, %v878
        %v920 = vadd.f32 %v796, %v881
        %v921 = vadd.f32 %v797, %v883
        %v922 = vadd.f32 %v798, %v886
        %v923 = vadd.f32 %v799, %v888
        %v924 = vadd.f32 %v800, %v891
        %v925 = vadd.f32 %v801, %v893
        %v926 = vlaneseq
        %v927 = vshrl.u32 %v926, 7
        %v928 = vsub.s32 1, %v927
        %v929 = vrot.slane %v530, %v928
        %v930 = vmul.f32 %v539, %v929
        %v931 = vmul.f32 %v540, %v929
        %v932 = vmul.f32 %v541, %v929
        %v933 = vmul.f32 %v542, %v929
        %v934 = vmul.f32 %v543, %v929
        %v935 = vmul.f32 %v544, %v929
        %v936 = vmul.f32 %v545, %v929
        %v937 = vmul.f32 %v546, %v929
        %v938 = vmul.f32 %v547, %v929
        %v939 = vmul.f32 %v548, %v929
        %v940 = vmul.f32 %v549, %v929
        %v941 = vmul.f32 %v550, %v929
        %v942 = vmul.f32 %v551, %v929
        %v943 = vmul.f32 %v552, %v929
        %v944 = vmul.f32 %v553, %v929
        %v945 = vmul.f32 %v554, %v929
        %v946 = vmul.f32 %v555, %v929
        %v947 = vmul.f32 %v556, %v929
        %v948 = vmul.f32 %v557, %v929
        %v949 = vmul.f32 %v558, %v929
        %v950 = vmul.f32 %v559, %v929
        %v951 = vmul.f32 %v560, %v929
        %v952 = vmul.f32 %v561, %v929
        %v953 = vmul.f32 %v562, %v929
        %v978 = vrot.slane %v930, 1
        %v979 = vrot.slane %v931, 1
        %v980 = vsel %vm729, %v978, %v979
        %v981 = vrot.slane %v932, 1
        %v982 = vsel %vm729, %v979, %v981
        %v983 = vrot.slane %v933, 1
        %v984 = vrot.slane %v934, 1
        %v985 = vsel %vm729, %v983, %v984
        %v986 = vrot.slane %v935, 1
        %v987 = vsel %vm729, %v984, %v986
        %v988 = vrot.slane %v936, 1
        %v989 = vrot.slane %v937, 1
        %v990 = vsel %vm729, %v988, %v989
        %v991 = vrot.slane %v938, 1
        %v992 = vsel %vm729, %v989, %v991
        %v993 = vrot.slane %v939, 1
        %v994 = vrot.slane %v940, 1
        %v995 = vsel %vm729, %v993, %v994
        %v996 = vrot.slane %v941, 1
        %v997 = vsel %vm729, %v994, %v996
        %v998 = vrot.slane %v942, 1
        %v999 = vrot.slane %v943, 1
        %v1000 = vsel %vm729, %v998, %v999
        %v1001 = vrot.slane %v944, 1
        %v1002 = vsel %vm729, %v999, %v1001
        %v1003 = vrot.slane %v945, 1
        %v1004 = vrot.slane %v946, 1
        %v1005 = vsel %vm729, %v1003, %v1004
        %v1006 = vrot.slane %v947, 1
        %v1007 = vsel %vm729, %v1004, %v1006
        %v1008 = vrot.slane %v948, 1
        %v1009 = vrot.slane %v949, 1
        %v1010 = vsel %vm729, %v1008, %v1009
        %v1011 = vrot.slane %v950, 1
        %v1012 = vsel %vm729, %v1009, %v1011
        %v1013 = vrot.slane %v951, 1
        %v1014 = vrot.slane %v952, 1
        %v1015 = vsel %vm729, %v1013, %v1014
        %v1016 = vrot.slane %v953, 1
        %v1017 = vsel %vm729, %v1014, %v1016
        %v1034 = vadd.f32 %v910, %v980
        %v1035 = vadd.f32 %v911, %v982
        %v1036 = vadd.f32 %v912, %v985
        %v1037 = vadd.f32 %v913, %v987
        %v1038 = vadd.f32 %v914, %v990
        %v1039 = vadd.f32 %v915, %v992
        %v1040 = vadd.f32 %v916, %v995
        %v1041 = vadd.f32 %v917, %v997
        %v1042 = vadd.f32 %v918, %v1000
        %v1043 = vadd.f32 %v919, %v1002
        %v1044 = vadd.f32 %v920, %v1005
        %v1045 = vadd.f32 %v921, %v1007
        %v1046 = vadd.f32 %v922, %v1010
        %v1047 = vadd.f32 %v923, %v1012
        %v1048 = vadd.f32 %v924, %v1015
        %v1049 = vadd.f32 %v925, %v1017
        %v1050 = vlaneseq
        %v1051 = vshrl.u32 %v1050, 7
        %v1052 = vsub.s32 2, %v1051
        %v1053 = vrot.slane %v528, %v1052
        %v1054 = vmul.f32 %v533, %v1053
        %v1055 = vmul.f32 %v534, %v1053
        %v1056 = vmul.f32 %v535, %v1053
        %v1057 = vmul.f32 %v536, %v1053
        %v1058 = vmul.f32 %v537, %v1053
        %v1059 = vmul.f32 %v538, %v1053
        %v1060 = vmul.f32 %v539, %v1053
        %v1061 = vmul.f32 %v540, %v1053
        %v1062 = vmul.f32 %v541, %v1053
        %v1063 = vmul.f32 %v542, %v1053
        %v1064 = vmul.f32 %v543, %v1053
        %v1065 = vmul.f32 %v544, %v1053
        %v1066 = vmul.f32 %v545, %v1053
        %v1067 = vmul.f32 %v546, %v1053
        %v1068 = vmul.f32 %v547, %v1053
        %v1069 = vmul.f32 %v548, %v1053
        %v1070 = vmul.f32 %v549, %v1053
        %v1071 = vmul.f32 %v550, %v1053
        %v1072 = vmul.f32 %v551, %v1053
        %v1073 = vmul.f32 %v552, %v1053
        %v1074 = vmul.f32 %v553, %v1053
        %v1075 = vmul.f32 %v554, %v1053
        %v1076 = vmul.f32 %v555, %v1053
        %v1077 = vmul.f32 %v556, %v1053
        %vm1102 = vcmask 1045504
        %v1103 = vrot.slane %v1054, 2
        %v1104 = vrot.slane %v1055, 2
        %v1105 = vsel %vm1102, %v1103, %v1104
        %v1106 = vrot.slane %v1056, 2
        %v1107 = vsel %vm1102, %v1104, %v1106
        %v1108 = vrot.slane %v1057, 2
        %v1109 = vrot.slane %v1058, 2
        %v1110 = vsel %vm1102, %v1108, %v1109
        %v1111 = vrot.slane %v1059, 2
        %v1112 = vsel %vm1102, %v1109, %v1111
        %v1113 = vrot.slane %v1060, 2
        %v1114 = vrot.slane %v1061, 2
        %v1115 = vsel %vm1102, %v1113, %v1114
        %v1116 = vrot.slane %v1062, 2
        %v1117 = vsel %vm1102, %v1114, %v1116
        %v1118 = vrot.slane %v1063, 2
        %v1119 = vrot.slane %v1064, 2
        %v1120 = vsel %vm1102, %v1118, %v1119
        %v1121 = vrot.slane %v1065, 2
        %v1122 = vsel %vm1102, %v1119, %v1121
        %v1123 = vrot.slane %v1066, 2
        %v1124 = vrot.slane %v1067, 2
        %v1125 = vsel %vm1102, %v1123, %v1124
        %v1126 = vrot.slane %v1068, 2
        %v1127 = vsel %vm1102, %v1124, %v1126
        %v1128 = vrot.slane %v1069, 2
        %v1129 = vrot.slane %v1070, 2
        %v1130 = vsel %vm1102, %v1128, %v1129
        %v1131 = vrot.slane %v1071, 2
        %v1132 = vsel %vm1102, %v1129, %v1131
        %v1133 = vrot.slane %v1072, 2
        %v1134 = vrot.slane %v1073, 2
        %v1135 = vsel %vm1102, %v1133, %v1134
        %v1136 = vrot.slane %v1074, 2
        %v1137 = vsel %vm1102, %v1134, %v1136
        %v1138 = vrot.slane %v1075, 2
        %v1139 = vrot.slane %v1076, 2
        %v1140 = vsel %vm1102, %v1138, %v1139
        %v1141 = vrot.slane %v1077, 2
        %v1142 = vsel %vm1102, %v1139, %v1141
        %v1159 = vadd.f32 %v1034, %v1105
        %v1160 = vadd.f32 %v1035, %v1107
        %v1161 = vadd.f32 %v1036, %v1110
        %v1162 = vadd.f32 %v1037, %v1112
        %v1163 = vadd.f32 %v1038, %v1115
        %v1164 = vadd.f32 %v1039, %v1117
        %v1165 = vadd.f32 %v1040, %v1120
        %v1166 = vadd.f32 %v1041, %v1122
        %v1167 = vadd.f32 %v1042, %v1125
        %v1168 = vadd.f32 %v1043, %v1127
        %v1169 = vadd.f32 %v1044, %v1130
        %v1170 = vadd.f32 %v1045, %v1132
        %v1171 = vadd.f32 %v1046, %v1135
        %v1172 = vadd.f32 %v1047, %v1137
        %v1173 = vadd.f32 %v1048, %v1140
        %v1174 = vadd.f32 %v1049, %v1142
        %v1175 = vlaneseq
        %v1176 = vshrl.u32 %v1175, 7
        %v1177 = vsub.s32 2, %v1176
        %v1178 = vrot.slane %v529, %v1177
        %v1179 = vmul.f32 %v536, %v1178
        %v1180 = vmul.f32 %v537, %v1178
        %v1181 = vmul.f32 %v538, %v1178
        %v1182 = vmul.f32 %v539, %v1178
        %v1183 = vmul.f32 %v540, %v1178
        %v1184 = vmul.f32 %v541, %v1178
        %v1185 = vmul.f32 %v542, %v1178
        %v1186 = vmul.f32 %v543, %v1178
        %v1187 = vmul.f32 %v544, %v1178
        %v1188 = vmul.f32 %v545, %v1178
        %v1189 = vmul.f32 %v546, %v1178
        %v1190 = vmul.f32 %v547, %v1178
        %v1191 = vmul.f32 %v548, %v1178
        %v1192 = vmul.f32 %v549, %v1178
        %v1193 = vmul.f32 %v550, %v1178
        %v1194 = vmul.f32 %v551, %v1178
        %v1195 = vmul.f32 %v552, %v1178
        %v1196 = vmul.f32 %v553, %v1178
        %v1197 = vmul.f32 %v554, %v1178
        %v1198 = vmul.f32 %v555, %v1178
        %v1199 = vmul.f32 %v556, %v1178
        %v1200 = vmul.f32 %v557, %v1178
        %v1201 = vmul.f32 %v558, %v1178
        %v1202 = vmul.f32 %v559, %v1178
        %v1227 = vrot.slane %v1179, 2
        %v1228 = vrot.slane %v1180, 2
        %v1229 = vsel %vm1102, %v1227, %v1228
        %v1230 = vrot.slane %v1181, 2
        %v1231 = vsel %vm1102, %v1228, %v1230
        %v1232 = vrot.slane %v1182, 2
        %v1233 = vrot.slane %v1183, 2
        %v1234 = vsel %vm1102, %v1232, %v1233
        %v1235 = vrot.slane %v1184, 2
        %v1236 = vsel %vm1102, %v1233, %v1235
        %v1237 = vrot.slane %v1185, 2
        %v1238 = vrot.slane %v1186, 2
        %v1239 = vsel %vm1102, %v1237, %v1238
        %v1240 = vrot.slane %v1187, 2
        %v1241 = vsel %vm1102, %v1238, %v1240
        %v1242 = vrot.slane %v1188, 2
        %v1243 = vrot.slane %v1189, 2
        %v1244 = vsel %vm1102, %v1242, %v1243
        %v1245 = vrot.slane %v1190, 2
        %v1246 = vsel %vm1102, %v1243, %v1245
        %v1247 = vrot.slane %v1191, 2
        %v1248 = vrot.slane %v1192, 2
        %v1249 = vsel %vm1102, %v1247, %v1248
        %v1250 = vrot.slane %v1193, 2
        %v1251 = vsel %vm1102, %v1248, %v1250
        %v1252 = vrot.slane %v1194, 2
        %v1253 = vrot.slane %v1195, 2
        %v1254 = vsel %vm1102, %v1252, %v1253
        %v1255 = vrot.slane %v1196, 2
        %v1256 = vsel %vm1102, %v1253, %v1255
        %v1257 = vrot.slane %v1197, 2
        %v1258 = vrot.slane %v1198, 2
        %v1259 = vsel %vm1102, %v1257, %v1258
        %v1260 = vrot.slane %v1199, 2
        %v1261 = vsel %vm1102, %v1258, %v1260
        %v1262 = vrot.slane %v1200, 2
        %v1263 = vrot.slane %v1201, 2
        %v1264 = vsel %vm1102, %v1262, %v1263
        %v1265 = vrot.slane %v1202, 2
        %v1266 = vsel %vm1102, %v1263, %v1265
        %v1283 = vadd.f32 %v1159, %v1229
        %v1284 = vadd.f32 %v1160, %v1231
        %v1285 = vadd.f32 %v1161, %v1234
        %v1286 = vadd.f32 %v1162, %v1236
        %v1287 = vadd.f32 %v1163, %v1239
        %v1288 = vadd.f32 %v1164, %v1241
        %v1289 = vadd.f32 %v1165, %v1244
        %v1290 = vadd.f32 %v1166, %v1246
        %v1291 = vadd.f32 %v1167, %v1249
        %v1292 = vadd.f32 %v1168, %v1251
        %v1293 = vadd.f32 %v1169, %v1254
        %v1294 = vadd.f32 %v1170, %v1256
        %v1295 = vadd.f32 %v1171, %v1259
        %v1296 = vadd.f32 %v1172, %v1261
        %v1297 = vadd.f32 %v1173, %v1264
        %v1298 = vadd.f32 %v1174, %v1266
        %v1299 = vlaneseq
        %v1300 = vshrl.u32 %v1299, 7
        %v1301 = vsub.s32 2, %v1300
        %v1302 = vrot.slane %v530, %v1301
        %v1303 = vmul.f32 %v539, %v1302
        %v1304 = vmul.f32 %v540, %v1302
        %v1305 = vmul.f32 %v541, %v1302
        %v1306 = vmul.f32 %v542, %v1302
        %v1307 = vmul.f32 %v543, %v1302
        %v1308 = vmul.f32 %v544, %v1302
        %v1309 = vmul.f32 %v545, %v1302
        %v1310 = vmul.f32 %v546, %v1302
        %v1311 = vmul.f32 %v547, %v1302
        %v1312 = vmul.f32 %v548, %v1302
        %v1313 = vmul.f32 %v549, %v1302
        %v1314 = vmul.f32 %v550, %v1302
        %v1315 = vmul.f32 %v551, %v1302
        %v1316 = vmul.f32 %v552, %v1302
        %v1317 = vmul.f32 %v553, %v1302
        %v1318 = vmul.f32 %v554, %v1302
        %v1319 = vmul.f32 %v555, %v1302
        %v1320 = vmul.f32 %v556, %v1302
        %v1321 = vmul.f32 %v557, %v1302
        %v1322 = vmul.f32 %v558, %v1302
        %v1323 = vmul.f32 %v559, %v1302
        %v1324 = vmul.f32 %v560, %v1302
        %v1325 = vmul.f32 %v561, %v1302
        %v1326 = vmul.f32 %v562, %v1302
        %v1351 = vrot.slane %v1303, 2
        %v1352 = vrot.slane %v1304, 2
        %v1353 = vsel %vm1102, %v1351, %v1352
        %v1354 = vrot.slane %v1305, 2
        %v1355 = vsel %vm1102, %v1352, %v1354
        %v1356 = vrot.slane %v1306, 2
        %v1357 = vrot.slane %v1307, 2
        %v1358 = vsel %vm1102, %v1356, %v1357
        %v1359 = vrot.slane %v1308, 2
        %v1360 = vsel %vm1102, %v1357, %v1359
        %v1361 = vrot.slane %v1309, 2
        %v1362 = vrot.slane %v1310, 2
        %v1363 = vsel %vm1102, %v1361, %v1362
        %v1364 = vrot.slane %v1311, 2
        %v1365 = vsel %vm1102, %v1362, %v1364
        %v1366 = vrot.slane %v1312, 2
        %v1367 = vrot.slane %v1313, 2
        %v1368 = vsel %vm1102, %v1366, %v1367
        %v1369 = vrot.slane %v1314, 2
        %v1370 = vsel %vm1102, %v1367, %v1369
        %v1371 = vrot.slane %v1315, 2
        %v1372 = vrot.slane %v1316, 2
        %v1373 = vsel %vm1102, %v1371, %v1372
        %v1374 = vrot.slane %v1317, 2
        %v1375 = vsel %vm1102, %v1372, %v1374
        %v1376 = vrot.slane %v1318, 2
        %v1377 = vrot.slane %v1319, 2
        %v1378 = vsel %vm1102, %v1376, %v1377
        %v1379 = vrot.slane %v1320, 2
        %v1380 = vsel %vm1102, %v1377, %v1379
        %v1381 = vrot.slane %v1321, 2
        %v1382 = vrot.slane %v1322, 2
        %v1383 = vsel %vm1102, %v1381, %v1382
        %v1384 = vrot.slane %v1323, 2
        %v1385 = vsel %vm1102, %v1382, %v1384
        %v1386 = vrot.slane %v1324, 2
        %v1387 = vrot.slane %v1325, 2
        %v1388 = vsel %vm1102, %v1386, %v1387
        %v1389 = vrot.slane %v1326, 2
        %v1390 = vsel %vm1102, %v1387, %v1389
        %v1407 = vadd.f32 %v1283, %v1353
        %v1408 = vadd.f32 %v1284, %v1355
        %v1409 = vadd.f32 %v1285, %v1358
        %v1410 = vadd.f32 %v1286, %v1360
        %v1411 = vadd.f32 %v1287, %v1363
        %v1412 = vadd.f32 %v1288, %v1365
        %v1413 = vadd.f32 %v1289, %v1368
        %v1414 = vadd.f32 %v1290, %v1370
        %v1415 = vadd.f32 %v1291, %v1373
        %v1416 = vadd.f32 %v1292, %v1375
        %v1417 = vadd.f32 %v1293, %v1378
        %v1418 = vadd.f32 %v1294, %v1380
        %v1419 = vadd.f32 %v1295, %v1383
        %v1420 = vadd.f32 %v1296, %v1385
        %v1421 = vadd.f32 %v1297, %v1388
        %v1422 = vadd.f32 %v1298, %v1390
        %1423 = vst.msk [vmem:[%s385] sm:$0xff] %vm466, %v1407
        %1424 = vst.msk [vmem:[%s385 + $0x8] sm:$0xff] %vm466, %v1408
        %1425 = vst.msk [vmem:[%s385 + $0x10] sm:$0xff] %vm466, %v1409
        %1426 = vst.msk [vmem:[%s385 + $0x18] sm:$0xff] %vm466, %v1410
        %1427 = vst.msk [vmem:[%s385 + $0x20] sm:$0xff] %vm466, %v1411
        %1428 = vst.msk [vmem:[%s385 + $0x28] sm:$0xff] %vm466, %v1412
        %1429 = vst.msk [vmem:[%s385 + $0x30] sm:$0xff] %vm466, %v1413
        %1430 = vst.msk [vmem:[%s385 + $0x38] sm:$0xff] %vm466, %v1414
        %1431 = vst.msk [vmem:[%s385 + $0x40] sm:$0xff] %vm466, %v1415
        %1432 = vst.msk [vmem:[%s385 + $0x48] sm:$0xff] %vm466, %v1416
        %1433 = vst.msk [vmem:[%s385 + $0x50] sm:$0xff] %vm466, %v1417
        %1434 = vst.msk [vmem:[%s385 + $0x58] sm:$0xff] %vm466, %v1418
        %1435 = vst.msk [vmem:[%s385 + $0x60] sm:$0xff] %vm466, %v1419
        %1436 = vst.msk [vmem:[%s385 + $0x68] sm:$0xff] %vm466, %v1420
        %1437 = vst.msk [vmem:[%s385 + $0x70] sm:$0xff] %vm466, %v1421
        %1438 = vst.msk [vmem:[%s385 + $0x78] sm:$0xff] %vm466, %v1422
        %s1439 = scalar_lea.vmem [#allocation2], 192
        %v1440 = vld [vmem:[%s1439] sm:$0xff]
        %v1441 = vld [vmem:[%s1439 + $0x8] sm:$0xff]
        %v1442 = vld [vmem:[%s1439 + $0x10] sm:$0x3]
        %v1443 = vld [vmem:[%s1439 + $0x18] sm:$0xff]
        %v1444 = vld [vmem:[%s1439 + $0x20] sm:$0xff]
        %v1445 = vld [vmem:[%s1439 + $0x28] sm:$0x3]
        %v1446 = vld [vmem:[%s1439 + $0x30] sm:$0xff]
        %v1447 = vld [vmem:[%s1439 + $0x38] sm:$0xff]
        %v1448 = vld [vmem:[%s1439 + $0x40] sm:$0x3]
        %v1449 = vld [vmem:[%s1439 + $0x48] sm:$0xff]
        %v1450 = vld [vmem:[%s1439 + $0x50] sm:$0xff]
        %v1451 = vld [vmem:[%s1439 + $0x58] sm:$0x3]
        %v1452 = vld [vmem:[%s1439 + $0x60] sm:$0xff]
        %v1453 = vld [vmem:[%s1439 + $0x68] sm:$0xff]
        %v1454 = vld [vmem:[%s1439 + $0x70] sm:$0x3]
        %v1455 = vld [vmem:[%s1439 + $0x78] sm:$0xff]
        %v1456 = vld [vmem:[%s1439 + $0x80] sm:$0xff]
        %v1457 = vld [vmem:[%s1439 + $0x88] sm:$0x3]
        %v1458 = vld [vmem:[%s1439 + $0x90] sm:$0xff]
        %v1459 = vld [vmem:[%s1439 + $0x98] sm:$0xff]
        %v1460 = vld [vmem:[%s1439 + $0xa0] sm:$0x3]
        %v1461 = vld [vmem:[%s1439 + $0xa8] sm:$0xff]
        %v1462 = vld [vmem:[%s1439 + $0xb0] sm:$0xff]
        %v1463 = vld [vmem:[%s1439 + $0xb8] sm:$0x3]
        %v1464 = vld [vmem:[%s1439 + $0xc0] sm:$0xff]
        %v1465 = vld [vmem:[%s1439 + $0xc8] sm:$0xff]
        %v1466 = vld [vmem:[%s1439 + $0xd0] sm:$0x3]
        %v1467 = vld [vmem:[%s1439 + $0xd8] sm:$0xff]
        %v1468 = vld [vmem:[%s1439 + $0xe0] sm:$0xff]
        %v1469 = vld [vmem:[%s1439 + $0xe8] sm:$0x3]
        %v1470 = vmul.f32 %v1440, %v572
        %v1471 = vmul.f32 %v1441, %v572
        %v1472 = vmul.f32 %v1443, %v572
        %v1473 = vmul.f32 %v1444, %v572
        %v1474 = vmul.f32 %v1446, %v572
        %v1475 = vmul.f32 %v1447, %v572
        %v1476 = vmul.f32 %v1449, %v572
        %v1477 = vmul.f32 %v1450, %v572
        %v1478 = vmul.f32 %v1452, %v572
        %v1479 = vmul.f32 %v1453, %v572
        %v1480 = vmul.f32 %v1455, %v572
        %v1481 = vmul.f32 %v1456, %v572
        %v1482 = vmul.f32 %v1458, %v572
        %v1483 = vmul.f32 %v1459, %v572
        %v1484 = vmul.f32 %v1461, %v572
        %v1485 = vmul.f32 %v1462, %v572
        %v1486 = vadd.f32 %v567, %v1470
        %v1487 = vadd.f32 %v567, %v1471
        %v1488 = vadd.f32 %v567, %v1472
        %v1489 = vadd.f32 %v567, %v1473
        %v1490 = vadd.f32 %v567, %v1474
        %v1491 = vadd.f32 %v567, %v1475
        %v1492 = vadd.f32 %v567, %v1476
        %v1493 = vadd.f32 %v567, %v1477
        %v1494 = vadd.f32 %v567, %v1478
        %v1495 = vadd.f32 %v567, %v1479
        %v1496 = vadd.f32 %v567, %v1480
        %v1497 = vadd.f32 %v567, %v1481
        %v1498 = vadd.f32 %v567, %v1482
        %v1499 = vadd.f32 %v567, %v1483
        %v1500 = vadd.f32 %v567, %v1484
        %v1501 = vadd.f32 %v567, %v1485
        %v1502 = vmul.f32 %v1443, %v608
        %v1503 = vmul.f32 %v1444, %v608
        %v1504 = vmul.f32 %v1446, %v608
        %v1505 = vmul.f32 %v1447, %v608
        %v1506 = vmul.f32 %v1449, %v608
        %v1507 = vmul.f32 %v1450, %v608
        %v1508 = vmul.f32 %v1452, %v608
        %v1509 = vmul.f32 %v1453, %v608
        %v1510 = vmul.f32 %v1455, %v608
        %v1511 = vmul.f32 %v1456, %v608
        %v1512 = vmul.f32 %v1458, %v608
        %v1513 = vmul.f32 %v1459, %v608
        %v1514 = vmul.f32 %v1461, %v608
        %v1515 = vmul.f32 %v1462, %v608
        %v1516 = vmul.f32 %v1464, %v608
        %v1517 = vmul.f32 %v1465, %v608
        %v1518 = vadd.f32 %v1486, %v1502
        %v1519 = vadd.f32 %v1487, %v1503
        %v1520 = vadd.f32 %v1488, %v1504
        %v1521 = vadd.f32 %v1489, %v1505
        %v1522 = vadd.f32 %v1490, %v1506
        %v1523 = vadd.f32 %v1491, %v1507
        %v1524 = vadd.f32 %v1492, %v1508
        %v1525 = vadd.f32 %v1493, %v1509
        %v1526 = vadd.f32 %v1494, %v1510
        %v1527 = vadd.f32 %v1495, %v1511
        %v1528 = vadd.f32 %v1496, %v1512
        %v1529 = vadd.f32 %v1497, %v1513
        %v1530 = vadd.f32 %v1498, %v1514
        %v1531 = vadd.f32 %v1499, %v1515
        %v1532 = vadd.f32 %v1500, %v1516
        %v1533 = vadd.f32 %v1501, %v1517
        %v1534 = vmul.f32 %v1446, %v644
        %v1535 = vmul.f32 %v1447, %v644
        %v1536 = vmul.f32 %v1449, %v644
        %v1537 = vmul.f32 %v1450, %v644
        %v1538 = vmul.f32 %v1452, %v644
        %v1539 = vmul.f32 %v1453, %v644
        %v1540 = vmul.f32 %v1455, %v644
        %v1541 = vmul.f32 %v1456, %v644
        %v1542 = vmul.f32 %v1458, %v644
        %v1543 = vmul.f32 %v1459, %v644
        %v1544 = vmul.f32 %v1461, %v644
        %v1545 = vmul.f32 %v1462, %v644
        %v1546 = vmul.f32 %v1464, %v644
        %v1547 = vmul.f32 %v1465, %v644
        %v1548 = vmul.f32 %v1467, %v644
        %v1549 = vmul.f32 %v1468, %v644
        %v1550 = vadd.f32 %v1518, %v1534
        %v1551 = vadd.f32 %v1519, %v1535
        %v1552 = vadd.f32 %v1520, %v1536
        %v1553 = vadd.f32 %v1521, %v1537
        %v1554 = vadd.f32 %v1522, %v1538
        %v1555 = vadd.f32 %v1523, %v1539
        %v1556 = vadd.f32 %v1524, %v1540
        %v1557 = vadd.f32 %v1525, %v1541
        %v1558 = vadd.f32 %v1526, %v1542
        %v1559 = vadd.f32 %v1527, %v1543
        %v1560 = vadd.f32 %v1528, %v1544
        %v1561 = vadd.f32 %v1529, %v1545
        %v1562 = vadd.f32 %v1530, %v1546
        %v1563 = vadd.f32 %v1531, %v1547
        %v1564 = vadd.f32 %v1532, %v1548
        %v1565 = vadd.f32 %v1533, %v1549
        %v1566 = vmul.f32 %v1440, %v680
        %v1567 = vmul.f32 %v1441, %v680
        %v1568 = vmul.f32 %v1442, %v680
        %v1569 = vmul.f32 %v1443, %v680
        %v1570 = vmul.f32 %v1444, %v680
        %v1571 = vmul.f32 %v1445, %v680
        %v1572 = vmul.f32 %v1446, %v680
        %v1573 = vmul.f32 %v1447, %v680
        %v1574 = vmul.f32 %v1448, %v680
        %v1575 = vmul.f32 %v1449, %v680
        %v1576 = vmul.f32 %v1450, %v680
        %v1577 = vmul.f32 %v1451, %v680
        %v1578 = vmul.f32 %v1452, %v680
        %v1579 = vmul.f32 %v1453, %v680
        %v1580 = vmul.f32 %v1454, %v680
        %v1581 = vmul.f32 %v1455, %v680
        %v1582 = vmul.f32 %v1456, %v680
        %v1583 = vmul.f32 %v1457, %v680
        %v1584 = vmul.f32 %v1458, %v680
        %v1585 = vmul.f32 %v1459, %v680
        %v1586 = vmul.f32 %v1460, %v680
        %v1587 = vmul.f32 %v1461, %v680
        %v1588 = vmul.f32 %v1462, %v680
        %v1589 = vmul.f32 %v1463, %v680
        %v1614 = vrot.slane %v1566, 1
        %v1615 = vrot.slane %v1567, 1
        %v1616 = vsel %vm729, %v1614, %v1615
        %v1617 = vrot.slane %v1568, 1
        %v1618 = vsel %vm729, %v1615, %v1617
        %v1619 = vrot.slane %v1569, 1
        %v1620 = vrot.slane %v1570, 1
        %v1621 = vsel %vm729, %v1619, %v1620
        %v1622 = vrot.slane %v1571, 1
        %v1623 = vsel %vm729, %v1620, %v1622
        %v1624 = vrot.slane %v1572, 1
        %v1625 = vrot.slane %v1573, 1
        %v1626 = vsel %vm729, %v1624, %v1625
        %v1627 = vrot.slane %v1574, 1
        %v1628 = vsel %vm729, %v1625, %v1627
        %v1629 = vrot.slane %v1575, 1
        %v1630 = vrot.slane %v1576, 1
        %v1631 = vsel %vm729, %v1629, %v1630
        %v1632 = vrot.slane %v1577, 1
        %v1633 = vsel %vm729, %v1630, %v1632
        %v1634 = vrot.slane %v1578, 1
        %v1635 = vrot.slane %v1579, 1
        %v1636 = vsel %vm729, %v1634, %v1635
        %v1637 = vrot.slane %v1580, 1
        %v1638 = vsel %vm729, %v1635, %v1637
        %v1639 = vrot.slane %v1581, 1
        %v1640 = vrot.slane %v1582, 1
        %v1641 = vsel %vm729, %v1639, %v1640
        %v1642 = vrot.slane %v1583, 1
        %v1643 = vsel %vm729, %v1640, %v1642
        %v1644 = vrot.slane %v1584, 1
        %v1645 = vrot.slane %v1585, 1
        %v1646 = vsel %vm729, %v1644, %v1645
        %v1647 = vrot.slane %v1586, 1
        %v1648 = vsel %vm729, %v1645, %v1647
        %v1649 = vrot.slane %v1587, 1
        %v1650 = vrot.slane %v1588, 1
        %v1651 = vsel %vm729, %v1649, %v1650
        %v1652 = vrot.slane %v1589, 1
        %v1653 = vsel %vm729, %v1650, %v1652
        %v1670 = vadd.f32 %v1550, %v1616
        %v1671 = vadd.f32 %v1551, %v1618
        %v1672 = vadd.f32 %v1552, %v1621
        %v1673 = vadd.f32 %v1553, %v1623
        %v1674 = vadd.f32 %v1554, %v1626
        %v1675 = vadd.f32 %v1555, %v1628
        %v1676 = vadd.f32 %v1556, %v1631
        %v1677 = vadd.f32 %v1557, %v1633
        %v1678 = vadd.f32 %v1558, %v1636
        %v1679 = vadd.f32 %v1559, %v1638
        %v1680 = vadd.f32 %v1560, %v1641
        %v1681 = vadd.f32 %v1561, %v1643
        %v1682 = vadd.f32 %v1562, %v1646
        %v1683 = vadd.f32 %v1563, %v1648
        %v1684 = vadd.f32 %v1564, %v1651
        %v1685 = vadd.f32 %v1565, %v1653
        %v1686 = vmul.f32 %v1443, %v805
        %v1687 = vmul.f32 %v1444, %v805
        %v1688 = vmul.f32 %v1445, %v805
        %v1689 = vmul.f32 %v1446, %v805
        %v1690 = vmul.f32 %v1447, %v805
        %v1691 = vmul.f32 %v1448, %v805
        %v1692 = vmul.f32 %v1449, %v805
        %v1693 = vmul.f32 %v1450, %v805
        %v1694 = vmul.f32 %v1451, %v805
        %v1695 = vmul.f32 %v1452, %v805
        %v1696 = vmul.f32 %v1453, %v805
        %v1697 = vmul.f32 %v1454, %v805
        %v1698 = vmul.f32 %v1455, %v805
        %v1699 = vmul.f32 %v1456, %v805
        %v1700 = vmul.f32 %v1457, %v805
        %v1701 = vmul.f32 %v1458, %v805
        %v1702 = vmul.f32 %v1459, %v805
        %v1703 = vmul.f32 %v1460, %v805
        %v1704 = vmul.f32 %v1461, %v805
        %v1705 = vmul.f32 %v1462, %v805
        %v1706 = vmul.f32 %v1463, %v805
        %v1707 = vmul.f32 %v1464, %v805
        %v1708 = vmul.f32 %v1465, %v805
        %v1709 = vmul.f32 %v1466, %v805
        %v1734 = vrot.slane %v1686, 1
        %v1735 = vrot.slane %v1687, 1
        %v1736 = vsel %vm729, %v1734, %v1735
        %v1737 = vrot.slane %v1688, 1
        %v1738 = vsel %vm729, %v1735, %v1737
        %v1739 = vrot.slane %v1689, 1
        %v1740 = vrot.slane %v1690, 1
        %v1741 = vsel %vm729, %v1739, %v1740
        %v1742 = vrot.slane %v1691, 1
        %v1743 = vsel %vm729, %v1740, %v1742
        %v1744 = vrot.slane %v1692, 1
        %v1745 = vrot.slane %v1693, 1
        %v1746 = vsel %vm729, %v1744, %v1745
        %v1747 = vrot.slane %v1694, 1
        %v1748 = vsel %vm729, %v1745, %v1747
        %v1749 = vrot.slane %v1695, 1
        %v1750 = vrot.slane %v1696, 1
        %v1751 = vsel %vm729, %v1749, %v1750
        %v1752 = vrot.slane %v1697, 1
        %v1753 = vsel %vm729, %v1750, %v1752
        %v1754 = vrot.slane %v1698, 1
        %v1755 = vrot.slane %v1699, 1
        %v1756 = vsel %vm729, %v1754, %v1755
        %v1757 = vrot.slane %v1700, 1
        %v1758 = vsel %vm729, %v1755, %v1757
        %v1759 = vrot.slane %v1701, 1
        %v1760 = vrot.slane %v1702, 1
        %v1761 = vsel %vm729, %v1759, %v1760
        %v1762 = vrot.slane %v1703, 1
        %v1763 = vsel %vm729, %v1760, %v1762
        %v1764 = vrot.slane %v1704, 1
        %v1765 = vrot.slane %v1705, 1
        %v1766 = vsel %vm729, %v1764, %v1765
        %v1767 = vrot.slane %v1706, 1
        %v1768 = vsel %vm729, %v1765, %v1767
        %v1769 = vrot.slane %v1707, 1
        %v1770 = vrot.slane %v1708, 1
        %v1771 = vsel %vm729, %v1769, %v1770
        %v1772 = vrot.slane %v1709, 1
        %v1773 = vsel %vm729, %v1770, %v1772
        %v1790 = vadd.f32 %v1670, %v1736
        %v1791 = vadd.f32 %v1671, %v1738
        %v1792 = vadd.f32 %v1672, %v1741
        %v1793 = vadd.f32 %v1673, %v1743
        %v1794 = vadd.f32 %v1674, %v1746
        %v1795 = vadd.f32 %v1675, %v1748
        %v1796 = vadd.f32 %v1676, %v1751
        %v1797 = vadd.f32 %v1677, %v1753
        %v1798 = vadd.f32 %v1678, %v1756
        %v1799 = vadd.f32 %v1679, %v1758
        %v1800 = vadd.f32 %v1680, %v1761
        %v1801 = vadd.f32 %v1681, %v1763
        %v1802 = vadd.f32 %v1682, %v1766
        %v1803 = vadd.f32 %v1683, %v1768
        %v1804 = vadd.f32 %v1684, %v1771
        %v1805 = vadd.f32 %v1685, %v1773
        %v1806 = vmul.f32 %v1446, %v929
        %v1807 = vmul.f32 %v1447, %v929
        %v1808 = vmul.f32 %v1448, %v929
        %v1809 = vmul.f32 %v1449, %v929
        %v1810 = vmul.f32 %v1450, %v929
        %v1811 = vmul.f32 %v1451, %v929
        %v1812 = vmul.f32 %v1452, %v929
        %v1813 = vmul.f32 %v1453, %v929
        %v1814 = vmul.f32 %v1454, %v929
        %v1815 = vmul.f32 %v1455, %v929
        %v1816 = vmul.f32 %v1456, %v929
        %v1817 = vmul.f32 %v1457, %v929
        %v1818 = vmul.f32 %v1458, %v929
        %v1819 = vmul.f32 %v1459, %v929
        %v1820 = vmul.f32 %v1460, %v929
        %v1821 = vmul.f32 %v1461, %v929
        %v1822 = vmul.f32 %v1462, %v929
        %v1823 = vmul.f32 %v1463, %v929
        %v1824 = vmul.f32 %v1464, %v929
        %v1825 = vmul.f32 %v1465, %v929
        %v1826 = vmul.f32 %v1466, %v929
        %v1827 = vmul.f32 %v1467, %v929
        %v1828 = vmul.f32 %v1468, %v929
        %v1829 = vmul.f32 %v1469, %v929
        %v1854 = vrot.slane %v1806, 1
        %v1855 = vrot.slane %v1807, 1
        %v1856 = vsel %vm729, %v1854, %v1855
        %v1857 = vrot.slane %v1808, 1
        %v1858 = vsel %vm729, %v1855, %v1857
        %v1859 = vrot.slane %v1809, 1
        %v1860 = vrot.slane %v1810, 1
        %v1861 = vsel %vm729, %v1859, %v1860
        %v1862 = vrot.slane %v1811, 1
        %v1863 = vsel %vm729, %v1860, %v1862
        %v1864 = vrot.slane %v1812, 1
        %v1865 = vrot.slane %v1813, 1
        %v1866 = vsel %vm729, %v1864, %v1865
        %v1867 = vrot.slane %v1814, 1
        %v1868 = vsel %vm729, %v1865, %v1867
        %v1869 = vrot.slane %v1815, 1
        %v1870 = vrot.slane %v1816, 1
        %v1871 = vsel %vm729, %v1869, %v1870
        %v1872 = vrot.slane %v1817, 1
        %v1873 = vsel %vm729, %v1870, %v1872
        %v1874 = vrot.slane %v1818, 1
        %v1875 = vrot.slane %v1819, 1
        %v1876 = vsel %vm729, %v1874, %v1875
        %v1877 = vrot.slane %v1820, 1
        %v1878 = vsel %vm729, %v1875, %v1877
        %v1879 = vrot.slane %v1821, 1
        %v1880 = vrot.slane %v1822, 1
        %v1881 = vsel %vm729, %v1879, %v1880
        %v1882 = vrot.slane %v1823, 1
        %v1883 = vsel %vm729, %v1880, %v1882
        %v1884 = vrot.slane %v1824, 1
        %v1885 = vrot.slane %v1825, 1
        %v1886 = vsel %vm729, %v1884, %v1885
        %v1887 = vrot.slane %v1826, 1
        %v1888 = vsel %vm729, %v1885, %v1887
        %v1889 = vrot.slane %v1827, 1
        %v1890 = vrot.slane %v1828, 1
        %v1891 = vsel %vm729, %v1889, %v1890
        %v1892 = vrot.slane %v1829, 1
        %v1893 = vsel %vm729, %v1890, %v1892
        %v1910 = vadd.f32 %v1790, %v1856
        %v1911 = vadd.f32 %v1791, %v1858
        %v1912 = vadd.f32 %v1792, %v1861
        %v1913 = vadd.f32 %v1793, %v1863
        %v1914 = vadd.f32 %v1794, %v1866
        %v1915 = vadd.f32 %v1795, %v1868
        %v1916 = vadd.f32 %v1796, %v1871
        %v1917 = vadd.f32 %v1797, %v1873
        %v1918 = vadd.f32 %v1798, %v1876
        %v1919 = vadd.f32 %v1799, %v1878
        %v1920 = vadd.f32 %v1800, %v1881
        %v1921 = vadd.f32 %v1801, %v1883
        %v1922 = vadd.f32 %v1802, %v1886
        %v1923 = vadd.f32 %v1803, %v1888
        %v1924 = vadd.f32 %v1804, %v1891
        %v1925 = vadd.f32 %v1805, %v1893
        %v1926 = vmul.f32 %v1440, %v1053
        %v1927 = vmul.f32 %v1441, %v1053
        %v1928 = vmul.f32 %v1442, %v1053
        %v1929 = vmul.f32 %v1443, %v1053
        %v1930 = vmul.f32 %v1444, %v1053
        %v1931 = vmul.f32 %v1445, %v1053
        %v1932 = vmul.f32 %v1446, %v1053
        %v1933 = vmul.f32 %v1447, %v1053
        %v1934 = vmul.f32 %v1448, %v1053
        %v1935 = vmul.f32 %v1449, %v1053
        %v1936 = vmul.f32 %v1450, %v1053
        %v1937 = vmul.f32 %v1451, %v1053
        %v1938 = vmul.f32 %v1452, %v1053
        %v1939 = vmul.f32 %v1453, %v1053
        %v1940 = vmul.f32 %v1454, %v1053
        %v1941 = vmul.f32 %v1455, %v1053
        %v1942 = vmul.f32 %v1456, %v1053
        %v1943 = vmul.f32 %v1457, %v1053
        %v1944 = vmul.f32 %v1458, %v1053
        %v1945 = vmul.f32 %v1459, %v1053
        %v1946 = vmul.f32 %v1460, %v1053
        %v1947 = vmul.f32 %v1461, %v1053
        %v1948 = vmul.f32 %v1462, %v1053
        %v1949 = vmul.f32 %v1463, %v1053
        %v1974 = vrot.slane %v1926, 2
        %v1975 = vrot.slane %v1927, 2
        %v1976 = vsel %vm1102, %v1974, %v1975
        %v1977 = vrot.slane %v1928, 2
        %v1978 = vsel %vm1102, %v1975, %v1977
        %v1979 = vrot.slane %v1929, 2
        %v1980 = vrot.slane %v1930, 2
        %v1981 = vsel %vm1102, %v1979, %v1980
        %v1982 = vrot.slane %v1931, 2
        %v1983 = vsel %vm1102, %v1980, %v1982
        %v1984 = vrot.slane %v1932, 2
        %v1985 = vrot.slane %v1933, 2
        %v1986 = vsel %vm1102, %v1984, %v1985
        %v1987 = vrot.slane %v1934, 2
        %v1988 = vsel %vm1102, %v1985, %v1987
        %v1989 = vrot.slane %v1935, 2
        %v1990 = vrot.slane %v1936, 2
        %v1991 = vsel %vm1102, %v1989, %v1990
        %v1992 = vrot.slane %v1937, 2
        %v1993 = vsel %vm1102, %v1990, %v1992
        %v1994 = vrot.slane %v1938, 2
        %v1995 = vrot.slane %v1939, 2
        %v1996 = vsel %vm1102, %v1994, %v1995
        %v1997 = vrot.slane %v1940, 2
        %v1998 = vsel %vm1102, %v1995, %v1997
        %v1999 = vrot.slane %v1941, 2
        %v2000 = vrot.slane %v1942, 2
        %v2001 = vsel %vm1102, %v1999, %v2000
        %v2002 = vrot.slane %v1943, 2
        %v2003 = vsel %vm1102, %v2000, %v2002
        %v2004 = vrot.slane %v1944, 2
        %v2005 = vrot.slane %v1945, 2
        %v2006 = vsel %vm1102, %v2004, %v2005
        %v2007 = vrot.slane %v1946, 2
        %v2008 = vsel %vm1102, %v2005, %v2007
        %v2009 = vrot.slane %v1947, 2
        %v2010 = vrot.slane %v1948, 2
        %v2011 = vsel %vm1102, %v2009, %v2010
        %v2012 = vrot.slane %v1949, 2
        %v2013 = vsel %vm1102, %v2010, %v2012
        %v2030 = vadd.f32 %v1910, %v1976
        %v2031 = vadd.f32 %v1911, %v1978
        %v2032 = vadd.f32 %v1912, %v1981
        %v2033 = vadd.f32 %v1913, %v1983
        %v2034 = vadd.f32 %v1914, %v1986
        %v2035 = vadd.f32 %v1915, %v1988
        %v2036 = vadd.f32 %v1916, %v1991
        %v2037 = vadd.f32 %v1917, %v1993
        %v2038 = vadd.f32 %v1918, %v1996
        %v2039 = vadd.f32 %v1919, %v1998
        %v2040 = vadd.f32 %v1920, %v2001
        %v2041 = vadd.f32 %v1921, %v2003
        %v2042 = vadd.f32 %v1922, %v2006
        %v2043 = vadd.f32 %v1923, %v2008
        %v2044 = vadd.f32 %v1924, %v2011
        %v2045 = vadd.f32 %v1925, %v2013
        %v2046 = vmul.f32 %v1443, %v1178
        %v2047 = vmul.f32 %v1444, %v1178
        %v2048 = vmul.f32 %v1445, %v1178
        %v2049 = vmul.f32 %v1446, %v1178
        %v2050 = vmul.f32 %v1447, %v1178
        %v2051 = vmul.f32 %v1448, %v1178
        %v2052 = vmul.f32 %v1449, %v1178
        %v2053 = vmul.f32 %v1450, %v1178
        %v2054 = vmul.f32 %v1451, %v1178
        %v2055 = vmul.f32 %v1452, %v1178
        %v2056 = vmul.f32 %v1453, %v1178
        %v2057 = vmul.f32 %v1454, %v1178
        %v2058 = vmul.f32 %v1455, %v1178
        %v2059 = vmul.f32 %v1456, %v1178
        %v2060 = vmul.f32 %v1457, %v1178
        %v2061 = vmul.f32 %v1458, %v1178
        %v2062 = vmul.f32 %v1459, %v1178
        %v2063 = vmul.f32 %v1460, %v1178
        %v2064 = vmul.f32 %v1461, %v1178
        %v2065 = vmul.f32 %v1462, %v1178
        %v2066 = vmul.f32 %v1463, %v1178
        %v2067 = vmul.f32 %v1464, %v1178
        %v2068 = vmul.f32 %v1465, %v1178
        %v2069 = vmul.f32 %v1466, %v1178
        %v2094 = vrot.slane %v2046, 2
        %v2095 = vrot.slane %v2047, 2
        %v2096 = vsel %vm1102, %v2094, %v2095
        %v2097 = vrot.slane %v2048, 2
        %v2098 = vsel %vm1102, %v2095, %v2097
        %v2099 = vrot.slane %v2049, 2
        %v2100 = vrot.slane %v2050, 2
        %v2101 = vsel %vm1102, %v2099, %v2100
        %v2102 = vrot.slane %v2051, 2
        %v2103 = vsel %vm1102, %v2100, %v2102
        %v2104 = vrot.slane %v2052, 2
        %v2105 = vrot.slane %v2053, 2
        %v2106 = vsel %vm1102, %v2104, %v2105
        %v2107 = vrot.slane %v2054, 2
        %v2108 = vsel %vm1102, %v2105, %v2107
        %v2109 = vrot.slane %v2055, 2
        %v2110 = vrot.slane %v2056, 2
        %v2111 = vsel %vm1102, %v2109, %v2110
        %v2112 = vrot.slane %v2057, 2
        %v2113 = vsel %vm1102, %v2110, %v2112
        %v2114 = vrot.slane %v2058, 2
        %v2115 = vrot.slane %v2059, 2
        %v2116 = vsel %vm1102, %v2114, %v2115
        %v2117 = vrot.slane %v2060, 2
        %v2118 = vsel %vm1102, %v2115, %v2117
        %v2119 = vrot.slane %v2061, 2
        %v2120 = vrot.slane %v2062, 2
        %v2121 = vsel %vm1102, %v2119, %v2120
        %v2122 = vrot.slane %v2063, 2
        %v2123 = vsel %vm1102, %v2120, %v2122
        %v2124 = vrot.slane %v2064, 2
        %v2125 = vrot.slane %v2065, 2
        %v2126 = vsel %vm1102, %v2124, %v2125
        %v2127 = vrot.slane %v2066, 2
        %v2128 = vsel %vm1102, %v2125, %v2127
        %v2129 = vrot.slane %v2067, 2
        %v2130 = vrot.slane %v2068, 2
        %v2131 = vsel %vm1102, %v2129, %v2130
        %v2132 = vrot.slane %v2069, 2
        %v2133 = vsel %vm1102, %v2130, %v2132
        %v2150 = vadd.f32 %v2030, %v2096
        %v2151 = vadd.f32 %v2031, %v2098
        %v2152 = vadd.f32 %v2032, %v2101
        %v2153 = vadd.f32 %v2033, %v2103
        %v2154 = vadd.f32 %v2034, %v2106
        %v2155 = vadd.f32 %v2035, %v2108
        %v2156 = vadd.f32 %v2036, %v2111
        %v2157 = vadd.f32 %v2037, %v2113
        %v2158 = vadd.f32 %v2038, %v2116
        %v2159 = vadd.f32 %v2039, %v2118
        %v2160 = vadd.f32 %v2040, %v2121
        %v2161 = vadd.f32 %v2041, %v2123
        %v2162 = vadd.f32 %v2042, %v2126
        %v2163 = vadd.f32 %v2043, %v2128
        %v2164 = vadd.f32 %v2044, %v2131
        %v2165 = vadd.f32 %v2045, %v2133
        %v2166 = vmul.f32 %v1446, %v1302
        %v2167 = vmul.f32 %v1447, %v1302
        %v2168 = vmul.f32 %v1448, %v1302
        %v2169 = vmul.f32 %v1449, %v1302
        %v2170 = vmul.f32 %v1450, %v1302
        %v2171 = vmul.f32 %v1451, %v1302
        %v2172 = vmul.f32 %v1452, %v1302
        %v2173 = vmul.f32 %v1453, %v1302
        %v2174 = vmul.f32 %v1454, %v1302
        %v2175 = vmul.f32 %v1455, %v1302
        %v2176 = vmul.f32 %v1456, %v1302
        %v2177 = vmul.f32 %v1457, %v1302
        %v2178 = vmul.f32 %v1458, %v1302
        %v2179 = vmul.f32 %v1459, %v1302
        %v2180 = vmul.f32 %v1460, %v1302
        %v2181 = vmul.f32 %v1461, %v1302
        %v2182 = vmul.f32 %v1462, %v1302
        %v2183 = vmul.f32 %v1463, %v1302
        %v2184 = vmul.f32 %v1464, %v1302
        %v2185 = vmul.f32 %v1465, %v1302
        %v2186 = vmul.f32 %v1466, %v1302
        %v2187 = vmul.f32 %v1467, %v1302
        %v2188 = vmul.f32 %v1468, %v1302
        %v2189 = vmul.f32 %v1469, %v1302
        %v2214 = vrot.slane %v2166, 2
        %v2215 = vrot.slane %v2167, 2
        %v2216 = vsel %vm1102, %v2214, %v2215
        %v2217 = vrot.slane %v2168, 2
        %v2218 = vsel %vm1102, %v2215, %v2217
        %v2219 = vrot.slane %v2169, 2
        %v2220 = vrot.slane %v2170, 2
        %v2221 = vsel %vm1102, %v2219, %v2220
        %v2222 = vrot.slane %v2171, 2
        %v2223 = vsel %vm1102, %v2220, %v2222
        %v2224 = vrot.slane %v2172, 2
        %v2225 = vrot.slane %v2173, 2
        %v2226 = vsel %vm1102, %v2224, %v2225
        %v2227 = vrot.slane %v2174, 2
        %v2228 = vsel %vm1102, %v2225, %v2227
        %v2229 = vrot.slane %v2175, 2
        %v2230 = vrot.slane %v2176, 2
        %v2231 = vsel %vm1102, %v2229, %v2230
        %v2232 = vrot.slane %v2177, 2
        %v2233 = vsel %vm1102, %v2230, %v2232
        %v2234 = vrot.slane %v2178, 2
        %v2235 = vrot.slane %v2179, 2
        %v2236 = vsel %vm1102, %v2234, %v2235
        %v2237 = vrot.slane %v2180, 2
        %v2238 = vsel %vm1102, %v2235, %v2237
        %v2239 = vrot.slane %v2181, 2
        %v2240 = vrot.slane %v2182, 2
        %v2241 = vsel %vm1102, %v2239, %v2240
        %v2242 = vrot.slane %v2183, 2
        %v2243 = vsel %vm1102, %v2240, %v2242
        %v2244 = vrot.slane %v2184, 2
        %v2245 = vrot.slane %v2185, 2
        %v2246 = vsel %vm1102, %v2244, %v2245
        %v2247 = vrot.slane %v2186, 2
        %v2248 = vsel %vm1102, %v2245, %v2247
        %v2249 = vrot.slane %v2187, 2
        %v2250 = vrot.slane %v2188, 2
        %v2251 = vsel %vm1102, %v2249, %v2250
        %v2252 = vrot.slane %v2189, 2
        %v2253 = vsel %vm1102, %v2250, %v2252
        %v2270 = vadd.f32 %v2150, %v2216
        %v2271 = vadd.f32 %v2151, %v2218
        %v2272 = vadd.f32 %v2152, %v2221
        %v2273 = vadd.f32 %v2153, %v2223
        %v2274 = vadd.f32 %v2154, %v2226
        %v2275 = vadd.f32 %v2155, %v2228
        %v2276 = vadd.f32 %v2156, %v2231
        %v2277 = vadd.f32 %v2157, %v2233
        %v2278 = vadd.f32 %v2158, %v2236
        %v2279 = vadd.f32 %v2159, %v2238
        %v2280 = vadd.f32 %v2160, %v2241
        %v2281 = vadd.f32 %v2161, %v2243
        %v2282 = vadd.f32 %v2162, %v2246
        %v2283 = vadd.f32 %v2163, %v2248
        %v2284 = vadd.f32 %v2164, %v2251
        %v2285 = vadd.f32 %v2165, %v2253
        %s2286 = scalar_lea.vmem %s385, 128 [#allocation11]
        %2287 = vst.msk [vmem:[%s2286] sm:$0xff] %vm466, %v2270
        %2288 = vst.msk [vmem:[%s2286 + $0x8] sm:$0xff] %vm466, %v2271
        %2289 = vst.msk [vmem:[%s2286 + $0x10] sm:$0xff] %vm466, %v2272
        %2290 = vst.msk [vmem:[%s2286 + $0x18] sm:$0xff] %vm466, %v2273
        %2291 = vst.msk [vmem:[%s2286 + $0x20] sm:$0xff] %vm466, %v2274
        %2292 = vst.msk [vmem:[%s2286 + $0x28] sm:$0xff] %vm466, %v2275
        %2293 = vst.msk [vmem:[%s2286 + $0x30] sm:$0xff] %vm466, %v2276
        %2294 = vst.msk [vmem:[%s2286 + $0x38] sm:$0xff] %vm466, %v2277
        %2295 = vst.msk [vmem:[%s2286 + $0x40] sm:$0xff] %vm466, %v2278
        %2296 = vst.msk [vmem:[%s2286 + $0x48] sm:$0xff] %vm466, %v2279
        %2297 = vst.msk [vmem:[%s2286 + $0x50] sm:$0xff] %vm466, %v2280
        %2298 = vst.msk [vmem:[%s2286 + $0x58] sm:$0xff] %vm466, %v2281
        %2299 = vst.msk [vmem:[%s2286 + $0x60] sm:$0xff] %vm466, %v2282
        %2300 = vst.msk [vmem:[%s2286 + $0x68] sm:$0xff] %vm466, %v2283
        %2301 = vst.msk [vmem:[%s2286 + $0x70] sm:$0xff] %vm466, %v2284
        %2302 = vst.msk [vmem:[%s2286 + $0x78] sm:$0xff] %vm466, %v2285
        %s2303 = sand.u32 %s190, 1
        %s2304 = scalar_lea.sflag [#allocation5], %s2303
        %s2305 = sand.u32 %s190, 1
        %s2306 = smul.addr %s2305, 256
        %s2307 = scalar_lea.vmem [#allocation11], %s2306
        // Predicated region
        $region73: #{tpu_custom_call.1} parent=39 // pred_check
          %p2308 = pneg %p200
        $region74: #{tpu_custom_call.1} parent=39 // pred_check_branch
          %2310 = sbr.rel (%p2308) target = $region76
        $region75: #{tpu_custom_call.1} parent=39 // pred_region
          %s2311 = smul.u32 16, %s31
          %s2313 = ssub.s32 4096, 4096
          %2314 = vsyncadd %s2304, %s2313
          %s2315 = smul.addr %s2311, 2
          %s2316 = smul.addr %s30, 32
          %s2317 = sadd.s32 %s2315, %s2316
          %s2318 = smul.addr %s2317, 128
          %s2319 = scalar_lea.hbm %s5, %s2318
          %s2320 = sshll.u32 %s2307, 4
          %s2321 = int_to_ptr.vmem [resolvable:$true] %s2320
          %2326 = dma.vmem_to_hbm [thread:$0]  %s2321, 4096, %s2319, %s2304, 128, 128, 8
        $region76: #{tpu_custom_call.1} parent=39 // pred_fallthru
          _
      $region40: #{tpu_custom_call.1} parent=5 // pred_fallthru
        _
      %p2327 = scmp.le.s32.totalorder 2, %s21
      // Predicated region
      $region77: #{tpu_custom_call.1} parent=5 // pred_check
        %p2328 = pneg %p2327
      $region78: #{tpu_custom_call.1} parent=5 // pred_check_branch
        %2330 = sbr.rel (%p2328) target = $region80
      $region79: #{tpu_custom_call.1} parent=5 // pred_region
        %s2331 = ssub.s32 %s21, 2
        // Predicated region
        $region81: #{tpu_custom_call.1} parent=79 // pred_check
          %p2332 = pneg %p206
        $region82: #{tpu_custom_call.1} parent=79 // pred_check_branch
          %2334 = sbr.rel (%p2332) target = $region84
        $region83: #{tpu_custom_call.1} parent=79 // pred_region
          %s2335 = sand.u32 %s191, 1
          %s2336 = scalar_lea.sflag [#allocation5], %s2335
          %s2337 = sand.u32 %s191, 1
          %s2338 = smul.addr %s2337, 256
          %s2339 = scalar_lea.vmem [#allocation11], %s2338
          %2340 = dma.done %s2336, 4096
        $region84: #{tpu_custom_call.1} parent=79 // pred_fallthru
          _
      $region80: #{tpu_custom_call.1} parent=5 // pred_fallthru
        _
    $region6: #{tpu_custom_call.1} parent=1 // loop_footer
      %s25 = sadd.s32 1, %s21
    $region7: #{tpu_custom_call.1} parent=1 // loop_footer_branch
      %20 = sbr.rel target = $region3
    $region8: #{tpu_custom_call.1} parent=1 // loop_exit
      _
    %2341 = vsyncpa [#allocation4], 1
    %s2342 = scalar_lea.sflag [#allocation4], 1
    %2343 = vsyncpa %s2342, 1
    %2344 = vsyncpa [#allocation7], 1
    %s2345 = scalar_lea.sflag [#allocation7], 1
    %2346 = vsyncpa %s2345, 1
    %2347 = vsyncpa [#allocation10], 1
    %2348 = vsyncpa [#allocation5], 1
    %s2349 = scalar_lea.sflag [#allocation5], 1
    %2350 = vsyncpa %s2349, 1

</llo_original>
